<compile_context>
chip_gen: v6e
topology: v6e:2x2x1
jax: 0.10.0
libtpu: 0.0.40
codegen_flags: <defaults>
</compile_context>

<pallas_src>
import jax
import jax.numpy as jnp
from jax.experimental import pallas as pl
from jax.experimental.pallas import tpu as pltpu

# ---- model hyper-parameters (small, consistent with the module) -------------
EMBED = 32
HEADS = 2
HEAD_DIM = EMBED // HEADS
FWD_EXP = 4
FF_DIM = FWD_EXP * EMBED
TRG_LEN = 8
SRC_LEN = 8
BATCH = 2
EPS = 1e-5                      # nn.LayerNorm default
MM_DTYPE = jnp.bfloat16         # MXU operand dtype for the weight matmuls

# ---- packed weight-slab row offsets (bf16 slab of width WMAT_W) --------------
WMAT_W = max(3 * EMBED, FF_DIM)             # 128
R_QKV1 = 0                                  # (E, 3E)  self-attn fused QKV (Q pre-scaled)
R_KV2 = R_QKV1 + EMBED                      # (2E, 2E) cross-attn fused K|V (block-diag)
R_O1 = R_KV2 + 2 * EMBED                    # (E, E)   self-attn out-proj
R_Q2 = R_O1 + EMBED                         # (E, E)   cross-attn Q (pre-scaled)
R_O2 = R_Q2 + EMBED                         # (E, E)   cross-attn out-proj
R_F1 = R_O2 + EMBED                         # (E, F)   FF first matmul
R_F2 = R_F1 + EMBED                         # (F, E)   FF second matmul
R_TOTAL = R_F2 + FF_DIM                     # 352 rows


def _layernorm(z, g, b):
    mu = jnp.mean(z, axis=-1, keepdims=True)
    var = jnp.mean((z - mu) ** 2, axis=-1, keepdims=True)
    return (z - mu) * jax.lax.rsqrt(var + EPS) * g + b


def decoder_block_kernel(acts_ref, masks_ref, wmat_ref, vecs_ref, out_ref):
    f32 = jnp.float32
    lo = MM_DTYPE
    N, T, S = BATCH, TRG_LEN, SRC_LEN
    E, D, H, F = EMBED, HEAD_DIM, HEADS, FF_DIM

    # ---- slab unpacking (static slices, free) --------------------------------
    acts = acts_ref[...]                          # (N, T+S, 2E) f32
    x2d = acts[:, :T, :E].reshape(N * T, E)       # decoder input
    kv2d = acts[:, T:, :].reshape(N * S, 2 * E)   # [key | value], pre-concat host-side

    masks = masks_ref[...]                        # (N, T+1, L)
    tmask = masks[:, :T, :T]                      # (N, T, T) causal / target mask
    smask = masks[:, T:T + 1, :S]                 # (N, 1, S) source padding mask

    vecs = vecs_ref[...]                          # (10, 128) f32, loaded once
    bf1 = vecs[0, :F]
    bo1, g0, be0 = vecs[1, :E], vecs[2, :E], vecs[3, :E]
    bo2, g1, be1 = vecs[4, :E], vecs[5, :E], vecs[6, :E]
    bf2, g2, be2 = vecs[7, :E], vecs[8, :E], vecs[9, :E]

    # ---- multi-head attention core (projections already done, f32) -----------
    def mha(q2d, k2d, v2d, mask, l_q, l_k):
        heads = []
        for h in range(H):                                   # static unroll, H=2
            sl = slice(h * D, (h + 1) * D)                   # free lane slice
            qh = q2d[:, sl].reshape(N, l_q, D)
            kh = k2d[:, sl].reshape(N, l_k, D)
            vh = v2d[:, sl].reshape(N, l_k, D)
            # (N, l_q, l_k) scores; 1/sqrt(E) already folded into the Q weights
            sc = jax.lax.dot_general(qh, kh, (((2,), (2,)), ((0,), (0,))),
                                     preferred_element_type=f32)
            sc = jnp.where(mask == 0.0, f32(-1e20), sc)
            sc = sc - jnp.max(sc, axis=-1, keepdims=True)
            p = jnp.exp(sc)
            p = p * pl.reciprocal(jnp.sum(p, axis=-1, keepdims=True), approx=True)
            ch = jax.lax.dot_general(p, vh, (((2,), (1,)), ((0,), (0,))),
                                     preferred_element_type=f32)   # (N, l_q, D)
            heads.append(ch.reshape(N * l_q, D))
        return jnp.concatenate(heads, axis=-1)               # head concat -> (N*l_q, E)

    # ---- masked self-attention + add & norm (dropout = identity) -------------
    w_qkv1 = wmat_ref[R_QKV1:R_QKV1 + E, 0:3 * E]            # (E, 3E) bf16
    qkv1 = jnp.dot(x2d.astype(lo), w_qkv1, preferred_element_type=f32)   # (N*T, 3E)
    cat1 = mha(qkv1[:, :E], qkv1[:, E:2 * E], qkv1[:, 2 * E:], tmask, T, T)
    w_o1 = wmat_ref[R_O1:R_O1 + E, 0:E]
    attn1 = jnp.dot(cat1.astype(lo), w_o1, preferred_element_type=f32) + bo1
    query = _layernorm(attn1 + x2d, g0, be0)                 # (N*T, E)

    # ---- TransformerBlock: cross-attention + add & norm -----------------------
    w_q2 = wmat_ref[R_Q2:R_Q2 + E, 0:E]
    q2 = jnp.dot(query.astype(lo), w_q2, preferred_element_type=f32)     # (N*T, E)
    w_kv2 = wmat_ref[R_KV2:R_KV2 + 2 * E, 0:2 * E]           # block-diag(Wk, Wv)
    kv2 = jnp.dot(kv2d.astype(lo), w_kv2, preferred_element_type=f32)    # (N*S, 2E)
    cat2 = mha(q2, kv2[:, :E], kv2[:, E:], smask, T, S)
    w_o2 = wmat_ref[R_O2:R_O2 + E, 0:E]
    attn2 = jnp.dot(cat2.astype(lo), w_o2, preferred_element_type=f32) + bo2
    x2 = _layernorm(attn2 + query, g1, be1)                  # (N*T, E)

    # ---- feed-forward + add & norm -------------------------------------------
    w_f1 = wmat_ref[R_F1:R_F1 + E, 0:F]
    hidden = jnp.dot(x2.astype(lo), w_f1, preferred_element_type=f32) + bf1
    hidden = jnp.maximum(hidden, 0.0)
    w_f2 = wmat_ref[R_F2:R_F2 + F, 0:E]
    ff = jnp.dot(hidden.astype(lo), w_f2, preferred_element_type=f32) + bf2
    out = _layernorm(ff + x2, g2, be2)                       # (N*T, E)

    out_ref[...] = out.astype(out_ref.dtype)


# ---- host-side packing -------------------------------------------------------
def _block_diag(w, copies):
    """Replicate the shared per-head (D,D) weight along the diagonal -> (E,E)."""
    d = w.shape[0]
    out = jnp.zeros((copies * d, copies * d), w.dtype)
    for h in range(copies):
        out = out.at[h * d:(h + 1) * d, h * d:(h + 1) * d].set(w)
    return out


def pack_params(params):
    (wq1, wk1, wv1, wo1, bo1, g0, be0,
     wq2, wk2, wv2, wo2, bo2, g1, be1,
     wf1, bf1, wf2, bf2, g2, be2) = params
    E, F, H = EMBED, FF_DIM, HEADS
    scale = jnp.float32(1.0 / (E ** 0.5))     # reference divides logits by sqrt(embed)

    # self-attention: fused QKV, block-diagonal over heads, Q pre-scaled
    w_qkv1 = jnp.concatenate([_block_diag(wq1 * scale, H),
                              _block_diag(wk1, H),
                              _block_diag(wv1, H)], axis=1)              # (E, 3E)
    # cross-attention: fused K|V on the [key | value] activation slab
    wq2_bd = _block_diag(wq2 * scale, H)                                 # (E, E)
    w_kv2 = jnp.zeros((2 * E, 2 * E), jnp.float32)
    w_kv2 = w_kv2.at[:E, :E].set(_block_diag(wk2, H))
    w_kv2 = w_kv2.at[E:, E:].set(_block_diag(wv2, H))                    # (2E, 2E)

    def pad_w(m):
        return jnp.pad(m, ((0, 0), (0, WMAT_W - m.shape[1])))

    wmat = jnp.concatenate(
        [pad_w(w_qkv1), pad_w(w_kv2), pad_w(wo1), pad_w(wq2_bd),
         pad_w(wo2), pad_w(wf1), pad_w(wf2)], axis=0).astype(MM_DTYPE)   # (352, 128)
    assert wmat.shape == (R_TOTAL, WMAT_W)

    def pad_v(v):
        v = v.reshape(-1).astype(jnp.float32)
        return jnp.pad(v, (0, WMAT_W - v.shape[0]))

    vecs = jnp.stack([pad_v(bf1), pad_v(bo1), pad_v(g0), pad_v(be0),
                      pad_v(bo2), pad_v(g1), pad_v(be1),
                      pad_v(bf2), pad_v(g2), pad_v(be2)], axis=0)        # (10, 128) f32
    return wmat, vecs


def decoder_block(x, value, key, src_mask, trg_mask, params):
    N, T, E = x.shape
    S = value.shape[1]
    assert (N, T, E, S) == (BATCH, TRG_LEN, EMBED, SRC_LEN)

    # activation slab (N, T+S, 2E): rows [:T] = [x | 0], rows [T:] = [key | value]
    x_pad = jnp.concatenate([x, jnp.zeros_like(x)], axis=-1)
    kv = jnp.concatenate([key, value], axis=-1)
    acts = jnp.concatenate([x_pad, kv], axis=1)

    # mask slab (N, T+1, max(T,S)): rows [:T] = trg_mask, row [T] = src_mask
    L = max(T, S)
    tm = jnp.pad(trg_mask, ((0, 0), (0, 0), (0, L - T)), constant_values=1.0)
    sm = jnp.pad(src_mask, ((0, 0), (0, 0), (0, L - S)), constant_values=1.0)
    masks = jnp.concatenate([tm, sm], axis=1)

    wmat, vecs = pack_params(params)

    vmem = pl.BlockSpec(memory_space=pltpu.MemorySpace.VMEM)
    out2d = pl.pallas_call(
        decoder_block_kernel,
        out_shape=jax.ShapeDtypeStruct((N * T, E), x.dtype),
        in_specs=[vmem, vmem, vmem, vmem],
        out_specs=vmem,
    )(acts, masks, wmat, vecs)
    return out2d.reshape(N, T, E)


def make_params(rng):
    """Deterministic synthetic weights matching the module's parameter shapes."""
    keys = jax.random.split(rng, 16)
    s = 0.1

    def rnd(k, shape):
        return jax.random.normal(k, shape, dtype=jnp.float32) * s

    D, E, F = HEAD_DIM, EMBED, FF_DIM
    ones = lambda n: jnp.ones((1, n), jnp.float32)
    zeros = lambda n: jnp.zeros((1, n), jnp.float32)

    params = [
        # masked self-attention
        rnd(keys[0], (D, D)), rnd(keys[1], (D, D)), rnd(keys[2], (D, D)),
        rnd(keys[3], (E, E)), zeros(E),
        # DecoderBlock.norm
        ones(E), zeros(E),
        # cross-attention
        rnd(keys[4], (D, D)), rnd(keys[5], (D, D)), rnd(keys[6], (D, D)),
        rnd(keys[7], (E, E)), zeros(E),
        # norm1
        ones(E), zeros(E),
        # feed-forward
        rnd(keys[8], (E, F)), zeros(F), rnd(keys[9], (F, E)), zeros(E),
        # norm2
        ones(E), zeros(E),
    ]
    return params


if __name__ == "__main__":
    root = jax.random.PRNGKey(0)
    k_x, k_v, k_k, k_p = jax.random.split(root, 4)

    x = jax.random.normal(k_x, (BATCH, TRG_LEN, EMBED), dtype=jnp.float32)
    value = jax.random.normal(k_v, (BATCH, SRC_LEN, EMBED), dtype=jnp.float32)
    key = jax.random.normal(k_k, (BATCH, SRC_LEN, EMBED), dtype=jnp.float32)

    # causal target mask (N, T, T): 1 = attend, 0 = masked
    trg_mask = jnp.tril(jnp.ones((TRG_LEN, TRG_LEN), jnp.float32))
    trg_mask = jnp.broadcast_to(trg_mask, (BATCH, TRG_LEN, TRG_LEN))
    # source padding mask (N, 1, S): second batch element has 2 padded tokens
    src_mask = jnp.ones((BATCH, 1, SRC_LEN), jnp.float32)
    src_mask = src_mask.at[1, 0, SRC_LEN - 2:].set(0.0)

    params = make_params(k_p)

    out = decoder_block(x, value, key, src_mask, trg_mask, params)
    out = jax.block_until_ready(out)
    assert out.shape == (BATCH, TRG_LEN, EMBED)
    assert bool(jnp.all(jnp.isfinite(out)))
    print("KERNEL_OK")
</pallas_src>

<mosaic_0001>
module attributes {stable_mosaic.version = 11 : i64} {
  func.func @decoder_block_kernel(%arg0: memref<2x16x64xf32, #tpu.memory_space<vmem>>, %arg1: memref<2x9x8xf32, #tpu.memory_space<vmem>>, %arg2: memref<352x128xbf16, #tpu.memory_space<vmem>>, %arg3: memref<10x128xf32, #tpu.memory_space<vmem>>, %arg4: memref<16x32xf32, #tpu.memory_space<vmem>>) attributes {dimension_semantics = [], scalar_prefetch = 0 : i64, scratch_operands = 0 : i64, tpu.core_type = #tpu.core_type<tc>} {
    %c0 = arith.constant 0 : index
    %c0_0 = arith.constant 0 : index
    %c0_1 = arith.constant 0 : index
    %0 = vector.load %arg0[%c0, %c0_0, %c0_1] : memref<2x16x64xf32, #tpu.memory_space<vmem>>, vector<2x16x64xf32>
    %1 = vector.extract_strided_slice %0 {offsets = [0, 0, 0], sizes = [2, 8, 32], strides = [1, 1, 1]} : vector<2x16x64xf32> to vector<2x8x32xf32>
    %2 = vector.shape_cast %1 : vector<2x8x32xf32> to vector<16x32xf32>
    %3 = vector.extract_strided_slice %0 {offsets = [0, 8, 0], sizes = [2, 8, 64], strides = [1, 1, 1]} : vector<2x16x64xf32> to vector<2x8x64xf32>
    %4 = vector.shape_cast %3 : vector<2x8x64xf32> to vector<16x64xf32>
    %c0_2 = arith.constant 0 : index
    %c0_3 = arith.constant 0 : index
    %c0_4 = arith.constant 0 : index
    %5 = vector.load %arg1[%c0_2, %c0_3, %c0_4] : memref<2x9x8xf32, #tpu.memory_space<vmem>>, vector<2x9x8xf32>
    %6 = vector.extract_strided_slice %5 {offsets = [0, 0, 0], sizes = [2, 8, 8], strides = [1, 1, 1]} : vector<2x9x8xf32> to vector<2x8x8xf32>
    %7 = vector.extract_strided_slice %5 {offsets = [0, 8, 0], sizes = [2, 1, 8], strides = [1, 1, 1]} : vector<2x9x8xf32> to vector<2x1x8xf32>
    %c0_5 = arith.constant 0 : index
    %c0_6 = arith.constant 0 : index
    %8 = vector.load %arg3[%c0_5, %c0_6] : memref<10x128xf32, #tpu.memory_space<vmem>>, vector<10x128xf32>
    %9 = vector.extract_strided_slice %8 {offsets = [0, 0], sizes = [1, 128], strides = [1, 1]} : vector<10x128xf32> to vector<1x128xf32>
    %10 = vector.shape_cast %9 : vector<1x128xf32> to vector<128xf32>
    %11 = vector.extract_strided_slice %8 {offsets = [1, 0], sizes = [1, 32], strides = [1, 1]} : vector<10x128xf32> to vector<1x32xf32>
    %12 = vector.shape_cast %11 : vector<1x32xf32> to vector<32xf32>
    %13 = vector.extract_strided_slice %8 {offsets = [2, 0], sizes = [1, 32], strides = [1, 1]} : vector<10x128xf32> to vector<1x32xf32>
    %14 = vector.shape_cast %13 : vector<1x32xf32> to vector<32xf32>
    %15 = vector.extract_strided_slice %8 {offsets = [3, 0], sizes = [1, 32], strides = [1, 1]} : vector<10x128xf32> to vector<1x32xf32>
    %16 = vector.shape_cast %15 : vector<1x32xf32> to vector<32xf32>
    %17 = vector.extract_strided_slice %8 {offsets = [4, 0], sizes = [1, 32], strides = [1, 1]} : vector<10x128xf32> to vector<1x32xf32>
    %18 = vector.shape_cast %17 : vector<1x32xf32> to vector<32xf32>
    %19 = vector.extract_strided_slice %8 {offsets = [5, 0], sizes = [1, 32], strides = [1, 1]} : vector<10x128xf32> to vector<1x32xf32>
    %20 = vector.shape_cast %19 : vector<1x32xf32> to vector<32xf32>
    %21 = vector.extract_strided_slice %8 {offsets = [6, 0], sizes = [1, 32], strides = [1, 1]} : vector<10x128xf32> to vector<1x32xf32>
    %22 = vector.shape_cast %21 : vector<1x32xf32> to vector<32xf32>
    %23 = vector.extract_strided_slice %8 {offsets = [7, 0], sizes = [1, 32], strides = [1, 1]} : vector<10x128xf32> to vector<1x32xf32>
    %24 = vector.shape_cast %23 : vector<1x32xf32> to vector<32xf32>
    %25 = vector.extract_strided_slice %8 {offsets = [8, 0], sizes = [1, 32], strides = [1, 1]} : vector<10x128xf32> to vector<1x32xf32>
    %26 = vector.shape_cast %25 : vector<1x32xf32> to vector<32xf32>
    %27 = vector.extract_strided_slice %8 {offsets = [9, 0], sizes = [1, 32], strides = [1, 1]} : vector<10x128xf32> to vector<1x32xf32>
    %28 = vector.shape_cast %27 : vector<1x32xf32> to vector<32xf32>
    %c0_7 = arith.constant 0 : index
    %c0_8 = arith.constant 0 : index
    %29 = vector.load %arg2[%c0_7, %c0_8] : memref<352x128xbf16, #tpu.memory_space<vmem>>, vector<32x96xbf16>
    %30 = arith.truncf %2 : vector<16x32xf32> to vector<16x32xbf16>
    %cst = arith.constant dense<0.000000e+00> : vector<16x96xf32>
    %31 = tpu.matmul %30, %29, %cst {dimension_numbers = #tpu.dot_dimension_numbers<[1], [0], [0], [1], [0, 0, 1, 1], [], []>} : vector<16x32xbf16>, vector<32x96xbf16>, vector<16x96xf32> -> vector<16x96xf32>
    %32 = vector.extract_strided_slice %31 {offsets = [0, 0], sizes = [16, 32], strides = [1, 1]} : vector<16x96xf32> to vector<16x32xf32>
    %33 = vector.extract_strided_slice %31 {offsets = [0, 32], sizes = [16, 32], strides = [1, 1]} : vector<16x96xf32> to vector<16x32xf32>
    %34 = vector.extract_strided_slice %31 {offsets = [0, 64], sizes = [16, 32], strides = [1, 1]} : vector<16x96xf32> to vector<16x32xf32>
    %35 = vector.extract_strided_slice %32 {offsets = [0, 0], sizes = [16, 16], strides = [1, 1]} : vector<16x32xf32> to vector<16x16xf32>
    %36 = vector.shape_cast %35 : vector<16x16xf32> to vector<2x8x16xf32>
    %37 = vector.extract_strided_slice %33 {offsets = [0, 0], sizes = [16, 16], strides = [1, 1]} : vector<16x32xf32> to vector<16x16xf32>
    %38 = vector.shape_cast %37 : vector<16x16xf32> to vector<2x8x16xf32>
    %39 = vector.extract_strided_slice %34 {offsets = [0, 0], sizes = [16, 16], strides = [1, 1]} : vector<16x32xf32> to vector<16x16xf32>
    %40 = vector.shape_cast %39 : vector<16x16xf32> to vector<2x8x16xf32>
    %cst_9 = arith.constant dense<0.000000e+00> : vector<2x8x8xf32>
    %41 = tpu.matmul %36, %38, %cst_9 {dimension_numbers = #tpu.dot_dimension_numbers<[2], [2], [1], [1], [0, 0, 0, 1, 1, 1], [0], [0]>} : vector<2x8x16xf32>, vector<2x8x16xf32>, vector<2x8x8xf32> -> vector<2x8x8xf32>
    %cst_10 = arith.constant 0.000000e+00 : f32
    %42 = vector.broadcast %cst_10 : f32 to vector<2x8x8xf32>
    %43 = arith.cmpf oeq, %6, %42 : vector<2x8x8xf32>
    %cst_11 = arith.constant -1.000000e+20 : f32
    %44 = vector.broadcast %cst_11 : f32 to vector<2x8x8xf32>
    %45 = arith.select %43, %44, %41 : vector<2x8x8xi1>, vector<2x8x8xf32>
    %cst_12 = arith.constant dense<0xFF800000> : vector<2x8xf32>
    %46 = vector.multi_reduction <maximumf>, %45, %cst_12 [2] : vector<2x8x8xf32> to vector<2x8xf32>
    %47 = vector.shape_cast %46 : vector<2x8xf32> to vector<2x8x1xf32>
    %48 = vector.broadcast %47 : vector<2x8x1xf32> to vector<2x8x8xf32>
    %49 = arith.subf %45, %48 : vector<2x8x8xf32>
    %50 = math.exp %49 : vector<2x8x8xf32>
    %cst_13 = arith.constant dense<0.000000e+00> : vector<2x8xf32>
    %51 = vector.multi_reduction <add>, %50, %cst_13 [2] : vector<2x8x8xf32> to vector<2x8xf32>
    %52 = vector.shape_cast %51 : vector<2x8xf32> to vector<2x8x1xf32>
    %53 = tpu.reciprocal %52 {approx = true} : vector<2x8x1xf32> -> vector<2x8x1xf32>
    %54 = vector.broadcast %53 : vector<2x8x1xf32> to vector<2x8x8xf32>
    %55 = arith.mulf %50, %54 : vector<2x8x8xf32>
    %cst_14 = arith.constant dense<0.000000e+00> : vector<2x8x16xf32>
    %56 = tpu.matmul %55, %40, %cst_14 {dimension_numbers = #tpu.dot_dimension_numbers<[2], [1], [1], [2], [0, 0, 0, 1, 1, 2], [0], [0]>} : vector<2x8x8xf32>, vector<2x8x16xf32>, vector<2x8x16xf32> -> vector<2x8x16xf32>
    %57 = vector.shape_cast %56 : vector<2x8x16xf32> to vector<16x16xf32>
    %58 = vector.extract_strided_slice %32 {offsets = [0, 16], sizes = [16, 16], strides = [1, 1]} : vector<16x32xf32> to vector<16x16xf32>
    %59 = vector.shape_cast %58 : vector<16x16xf32> to vector<2x8x16xf32>
    %60 = vector.extract_strided_slice %33 {offsets = [0, 16], sizes = [16, 16], strides = [1, 1]} : vector<16x32xf32> to vector<16x16xf32>
    %61 = vector.shape_cast %60 : vector<16x16xf32> to vector<2x8x16xf32>
    %62 = vector.extract_strided_slice %34 {offsets = [0, 16], sizes = [16, 16], strides = [1, 1]} : vector<16x32xf32> to vector<16x16xf32>
    %63 = vector.shape_cast %62 : vector<16x16xf32> to vector<2x8x16xf32>
    %cst_15 = arith.constant dense<0.000000e+00> : vector<2x8x8xf32>
    %64 = tpu.matmul %59, %61, %cst_15 {dimension_numbers = #tpu.dot_dimension_numbers<[2], [2], [1], [1], [0, 0, 0, 1, 1, 1], [0], [0]>} : vector<2x8x16xf32>, vector<2x8x16xf32>, vector<2x8x8xf32> -> vector<2x8x8xf32>
    %cst_16 = arith.constant 0.000000e+00 : f32
    %65 = vector.broadcast %cst_16 : f32 to vector<2x8x8xf32>
    %66 = arith.cmpf oeq, %6, %65 : vector<2x8x8xf32>
    %cst_17 = arith.constant -1.000000e+20 : f32
    %67 = vector.broadcast %cst_17 : f32 to vector<2x8x8xf32>
    %68 = arith.select %66, %67, %64 : vector<2x8x8xi1>, vector<2x8x8xf32>
    %cst_18 = arith.constant dense<0xFF800000> : vector<2x8xf32>
    %69 = vector.multi_reduction <maximumf>, %68, %cst_18 [2] : vector<2x8x8xf32> to vector<2x8xf32>
    %70 = vector.shape_cast %69 : vector<2x8xf32> to vector<2x8x1xf32>
    %71 = vector.broadcast %70 : vector<2x8x1xf32> to vector<2x8x8xf32>
    %72 = arith.subf %68, %71 : vector<2x8x8xf32>
    %73 = math.exp %72 : vector<2x8x8xf32>
    %cst_19 = arith.constant dense<0.000000e+00> : vector<2x8xf32>
    %74 = vector.multi_reduction <add>, %73, %cst_19 [2] : vector<2x8x8xf32> to vector<2x8xf32>
    %75 = vector.shape_cast %74 : vector<2x8xf32> to vector<2x8x1xf32>
    %76 = tpu.reciprocal %75 {approx = true} : vector<2x8x1xf32> -> vector<2x8x1xf32>
    %77 = vector.broadcast %76 : vector<2x8x1xf32> to vector<2x8x8xf32>
    %78 = arith.mulf %73, %77 : vector<2x8x8xf32>
    %cst_20 = arith.constant dense<0.000000e+00> : vector<2x8x16xf32>
    %79 = tpu.matmul %78, %63, %cst_20 {dimension_numbers = #tpu.dot_dimension_numbers<[2], [1], [1], [2], [0, 0, 0, 1, 1, 2], [0], [0]>} : vector<2x8x8xf32>, vector<2x8x16xf32>, vector<2x8x16xf32> -> vector<2x8x16xf32>
    %80 = vector.shape_cast %79 : vector<2x8x16xf32> to vector<16x16xf32>
    %81 = tpu.concatenate %57, %80 in 1 : vector<16x16xf32>, vector<16x16xf32> -> vector<16x32xf32>
    %c96 = arith.constant 96 : index
    %c0_21 = arith.constant 0 : index
    %82 = vector.load %arg2[%c96, %c0_21] : memref<352x128xbf16, #tpu.memory_space<vmem>>, vector<32x32xbf16>
    %83 = arith.truncf %81 : vector<16x32xf32> to vector<16x32xbf16>
    %cst_22 = arith.constant dense<0.000000e+00> : vector<16x32xf32>
    %84 = tpu.matmul %83, %82, %cst_22 {dimension_numbers = #tpu.dot_dimension_numbers<[1], [0], [0], [1], [0, 0, 1, 1], [], []>} : vector<16x32xbf16>, vector<32x32xbf16>, vector<16x32xf32> -> vector<16x32xf32>
    %85 = vector.shape_cast %12 : vector<32xf32> to vector<1x32xf32>
    %86 = vector.broadcast %85 : vector<1x32xf32> to vector<16x32xf32>
    %87 = arith.addf %84, %86 : vector<16x32xf32>
    %88 = arith.addf %87, %2 : vector<16x32xf32>
    %cst_23 = arith.constant dense<0.000000e+00> : vector<16xf32>
    %89 = vector.multi_reduction <add>, %88, %cst_23 [1] : vector<16x32xf32> to vector<16xf32>
    %90 = vector.shape_cast %89 : vector<16xf32> to vector<16x1xf32>
    %cst_24 = arith.constant 3.200000e+01 : f32
    %91 = vector.broadcast %cst_24 : f32 to vector<16x1xf32>
    %92 = arith.divf %90, %91 : vector<16x1xf32>
    %93 = vector.broadcast %92 : vector<16x1xf32> to vector<16x32xf32>
    %94 = arith.subf %88, %93 : vector<16x32xf32>
    %95 = arith.mulf %94, %94 : vector<16x32xf32>
    %cst_25 = arith.constant dense<0.000000e+00> : vector<16xf32>
    %96 = vector.multi_reduction <add>, %95, %cst_25 [1] : vector<16x32xf32> to vector<16xf32>
    %97 = vector.shape_cast %96 : vector<16xf32> to vector<16x1xf32>
    %cst_26 = arith.constant 3.200000e+01 : f32
    %98 = vector.broadcast %cst_26 : f32 to vector<16x1xf32>
    %99 = arith.divf %97, %98 : vector<16x1xf32>
    %100 = vector.broadcast %92 : vector<16x1xf32> to vector<16x32xf32>
    %101 = arith.subf %88, %100 : vector<16x32xf32>
    %cst_27 = arith.constant 9.99999974E-6 : f32
    %102 = vector.broadcast %cst_27 : f32 to vector<16x1xf32>
    %103 = arith.addf %99, %102 : vector<16x1xf32>
    %104 = math.rsqrt %103 : vector<16x1xf32>
    %105 = vector.broadcast %104 : vector<16x1xf32> to vector<16x32xf32>
    %106 = arith.mulf %101, %105 : vector<16x32xf32>
    %107 = vector.shape_cast %14 : vector<32xf32> to vector<1x32xf32>
    %108 = vector.broadcast %107 : vector<1x32xf32> to vector<16x32xf32>
    %109 = arith.mulf %106, %108 : vector<16x32xf32>
    %110 = vector.shape_cast %16 : vector<32xf32> to vector<1x32xf32>
    %111 = vector.broadcast %110 : vector<1x32xf32> to vector<16x32xf32>
    %112 = arith.addf %109, %111 : vector<16x32xf32>
    %c128 = arith.constant 128 : index
    %c0_28 = arith.constant 0 : index
    %113 = vector.load %arg2[%c128, %c0_28] : memref<352x128xbf16, #tpu.memory_space<vmem>>, vector<32x32xbf16>
    %114 = arith.truncf %112 : vector<16x32xf32> to vector<16x32xbf16>
    %cst_29 = arith.constant dense<0.000000e+00> : vector<16x32xf32>
    %115 = tpu.matmul %114, %113, %cst_29 {dimension_numbers = #tpu.dot_dimension_numbers<[1], [0], [0], [1], [0, 0, 1, 1], [], []>} : vector<16x32xbf16>, vector<32x32xbf16>, vector<16x32xf32> -> vector<16x32xf32>
    %c32 = arith.constant 32 : index
    %c0_30 = arith.constant 0 : index
    %116 = vector.load %arg2[%c32, %c0_30] : memref<352x128xbf16, #tpu.memory_space<vmem>>, vector<64x64xbf16>
    %117 = arith.truncf %4 : vector<16x64xf32> to vector<16x64xbf16>
    %cst_31 = arith.constant dense<0.000000e+00> : vector<16x64xf32>
    %118 = tpu.matmul %117, %116, %cst_31 {dimension_numbers = #tpu.dot_dimension_numbers<[1], [0], [0], [1], [0, 0, 1, 1], [], []>} : vector<16x64xbf16>, vector<64x64xbf16>, vector<16x64xf32> -> vector<16x64xf32>
    %119 = vector.extract_strided_slice %118 {offsets = [0, 0], sizes = [16, 32], strides = [1, 1]} : vector<16x64xf32> to vector<16x32xf32>
    %120 = vector.extract_strided_slice %118 {offsets = [0, 32], sizes = [16, 32], strides = [1, 1]} : vector<16x64xf32> to vector<16x32xf32>
    %121 = vector.extract_strided_slice %115 {offsets = [0, 0], sizes = [16, 16], strides = [1, 1]} : vector<16x32xf32> to vector<16x16xf32>
    %122 = vector.shape_cast %121 : vector<16x16xf32> to vector<2x8x16xf32>
    %123 = vector.extract_strided_slice %119 {offsets = [0, 0], sizes = [16, 16], strides = [1, 1]} : vector<16x32xf32> to vector<16x16xf32>
    %124 = vector.shape_cast %123 : vector<16x16xf32> to vector<2x8x16xf32>
    %125 = vector.extract_strided_slice %120 {offsets = [0, 0], sizes = [16, 16], strides = [1, 1]} : vector<16x32xf32> to vector<16x16xf32>
    %126 = vector.shape_cast %125 : vector<16x16xf32> to vector<2x8x16xf32>
    %cst_32 = arith.constant dense<0.000000e+00> : vector<2x8x8xf32>
    %127 = tpu.matmul %122, %124, %cst_32 {dimension_numbers = #tpu.dot_dimension_numbers<[2], [2], [1], [1], [0, 0, 0, 1, 1, 1], [0], [0]>} : vector<2x8x16xf32>, vector<2x8x16xf32>, vector<2x8x8xf32> -> vector<2x8x8xf32>
    %cst_33 = arith.constant 0.000000e+00 : f32
    %128 = vector.broadcast %cst_33 : f32 to vector<2x1x8xf32>
    %129 = arith.cmpf oeq, %7, %128 : vector<2x1x8xf32>
    %cst_34 = arith.constant -1.000000e+20 : f32
    %130 = vector.shape_cast %129 : vector<2x1x8xi1> to vector<2x1x8xi1>
    %131 = vector.broadcast %130 : vector<2x1x8xi1> to vector<2x8x8xi1>
    %132 = vector.broadcast %cst_34 : f32 to vector<2x8x8xf32>
    %133 = arith.select %131, %132, %127 : vector<2x8x8xi1>, vector<2x8x8xf32>
    %cst_35 = arith.constant dense<0xFF800000> : vector<2x8xf32>
    %134 = vector.multi_reduction <maximumf>, %133, %cst_35 [2] : vector<2x8x8xf32> to vector<2x8xf32>
    %135 = vector.shape_cast %134 : vector<2x8xf32> to vector<2x8x1xf32>
    %136 = vector.broadcast %135 : vector<2x8x1xf32> to vector<2x8x8xf32>
    %137 = arith.subf %133, %136 : vector<2x8x8xf32>
    %138 = math.exp %137 : vector<2x8x8xf32>
    %cst_36 = arith.constant dense<0.000000e+00> : vector<2x8xf32>
    %139 = vector.multi_reduction <add>, %138, %cst_36 [2] : vector<2x8x8xf32> to vector<2x8xf32>
    %140 = vector.shape_cast %139 : vector<2x8xf32> to vector<2x8x1xf32>
    %141 = tpu.reciprocal %140 {approx = true} : vector<2x8x1xf32> -> vector<2x8x1xf32>
    %142 = vector.broadcast %141 : vector<2x8x1xf32> to vector<2x8x8xf32>
    %143 = arith.mulf %138, %142 : vector<2x8x8xf32>
    %cst_37 = arith.constant dense<0.000000e+00> : vector<2x8x16xf32>
    %144 = tpu.matmul %143, %126, %cst_37 {dimension_numbers = #tpu.dot_dimension_numbers<[2], [1], [1], [2], [0, 0, 0, 1, 1, 2], [0], [0]>} : vector<2x8x8xf32>, vector<2x8x16xf32>, vector<2x8x16xf32> -> vector<2x8x16xf32>
    %145 = vector.shape_cast %144 : vector<2x8x16xf32> to vector<16x16xf32>
    %146 = vector.extract_strided_slice %115 {offsets = [0, 16], sizes = [16, 16], strides = [1, 1]} : vector<16x32xf32> to vector<16x16xf32>
    %147 = vector.shape_cast %146 : vector<16x16xf32> to vector<2x8x16xf32>
    %148 = vector.extract_strided_slice %119 {offsets = [0, 16], sizes = [16, 16], strides = [1, 1]} : vector<16x32xf32> to vector<16x16xf32>
    %149 = vector.shape_cast %148 : vector<16x16xf32> to vector<2x8x16xf32>
    %150 = vector.extract_strided_slice %120 {offsets = [0, 16], sizes = [16, 16], strides = [1, 1]} : vector<16x32xf32> to vector<16x16xf32>
    %151 = vector.shape_cast %150 : vector<16x16xf32> to vector<2x8x16xf32>
    %cst_38 = arith.constant dense<0.000000e+00> : vector<2x8x8xf32>
    %152 = tpu.matmul %147, %149, %cst_38 {dimension_numbers = #tpu.dot_dimension_numbers<[2], [2], [1], [1], [0, 0, 0, 1, 1, 1], [0], [0]>} : vector<2x8x16xf32>, vector<2x8x16xf32>, vector<2x8x8xf32> -> vector<2x8x8xf32>
    %cst_39 = arith.constant 0.000000e+00 : f32
    %153 = vector.broadcast %cst_39 : f32 to vector<2x1x8xf32>
    %154 = arith.cmpf oeq, %7, %153 : vector<2x1x8xf32>
    %cst_40 = arith.constant -1.000000e+20 : f32
    %155 = vector.shape_cast %154 : vector<2x1x8xi1> to vector<2x1x8xi1>
    %156 = vector.broadcast %155 : vector<2x1x8xi1> to vector<2x8x8xi1>
    %157 = vector.broadcast %cst_40 : f32 to vector<2x8x8xf32>
    %158 = arith.select %156, %157, %152 : vector<2x8x8xi1>, vector<2x8x8xf32>
    %cst_41 = arith.constant dense<0xFF800000> : vector<2x8xf32>
    %159 = vector.multi_reduction <maximumf>, %158, %cst_41 [2] : vector<2x8x8xf32> to vector<2x8xf32>
    %160 = vector.shape_cast %159 : vector<2x8xf32> to vector<2x8x1xf32>
    %161 = vector.broadcast %160 : vector<2x8x1xf32> to vector<2x8x8xf32>
    %162 = arith.subf %158, %161 : vector<2x8x8xf32>
    %163 = math.exp %162 : vector<2x8x8xf32>
    %cst_42 = arith.constant dense<0.000000e+00> : vector<2x8xf32>
    %164 = vector.multi_reduction <add>, %163, %cst_42 [2] : vector<2x8x8xf32> to vector<2x8xf32>
    %165 = vector.shape_cast %164 : vector<2x8xf32> to vector<2x8x1xf32>
    %166 = tpu.reciprocal %165 {approx = true} : vector<2x8x1xf32> -> vector<2x8x1xf32>
    %167 = vector.broadcast %166 : vector<2x8x1xf32> to vector<2x8x8xf32>
    %168 = arith.mulf %163, %167 : vector<2x8x8xf32>
    %cst_43 = arith.constant dense<0.000000e+00> : vector<2x8x16xf32>
    %169 = tpu.matmul %168, %151, %cst_43 {dimension_numbers = #tpu.dot_dimension_numbers<[2], [1], [1], [2], [0, 0, 0, 1, 1, 2], [0], [0]>} : vector<2x8x8xf32>, vector<2x8x16xf32>, vector<2x8x16xf32> -> vector<2x8x16xf32>
    %170 = vector.shape_cast %169 : vector<2x8x16xf32> to vector<16x16xf32>
    %171 = tpu.concatenate %145, %170 in 1 : vector<16x16xf32>, vector<16x16xf32> -> vector<16x32xf32>
    %c160 = arith.constant 160 : index
    %c0_44 = arith.constant 0 : index
    %172 = vector.load %arg2[%c160, %c0_44] : memref<352x128xbf16, #tpu.memory_space<vmem>>, vector<32x32xbf16>
    %173 = arith.truncf %171 : vector<16x32xf32> to vector<16x32xbf16>
    %cst_45 = arith.constant dense<0.000000e+00> : vector<16x32xf32>
    %174 = tpu.matmul %173, %172, %cst_45 {dimension_numbers = #tpu.dot_dimension_numbers<[1], [0], [0], [1], [0, 0, 1, 1], [], []>} : vector<16x32xbf16>, vector<32x32xbf16>, vector<16x32xf32> -> vector<16x32xf32>
    %175 = vector.shape_cast %18 : vector<32xf32> to vector<1x32xf32>
    %176 = vector.broadcast %175 : vector<1x32xf32> to vector<16x32xf32>
    %177 = arith.addf %174, %176 : vector<16x32xf32>
    %178 = arith.addf %177, %112 : vector<16x32xf32>
    %cst_46 = arith.constant dense<0.000000e+00> : vector<16xf32>
    %179 = vector.multi_reduction <add>, %178, %cst_46 [1] : vector<16x32xf32> to vector<16xf32>
    %180 = vector.shape_cast %179 : vector<16xf32> to vector<16x1xf32>
    %cst_47 = arith.constant 3.200000e+01 : f32
    %181 = vector.broadcast %cst_47 : f32 to vector<16x1xf32>
    %182 = arith.divf %180, %181 : vector<16x1xf32>
    %183 = vector.broadcast %182 : vector<16x1xf32> to vector<16x32xf32>
    %184 = arith.subf %178, %183 : vector<16x32xf32>
    %185 = arith.mulf %184, %184 : vector<16x32xf32>
    %cst_48 = arith.constant dense<0.000000e+00> : vector<16xf32>
    %186 = vector.multi_reduction <add>, %185, %cst_48 [1] : vector<16x32xf32> to vector<16xf32>
    %187 = vector.shape_cast %186 : vector<16xf32> to vector<16x1xf32>
    %cst_49 = arith.constant 3.200000e+01 : f32
    %188 = vector.broadcast %cst_49 : f32 to vector<16x1xf32>
    %189 = arith.divf %187, %188 : vector<16x1xf32>
    %190 = vector.broadcast %182 : vector<16x1xf32> to vector<16x32xf32>
    %191 = arith.subf %178, %190 : vector<16x32xf32>
    %cst_50 = arith.constant 9.99999974E-6 : f32
    %192 = vector.broadcast %cst_50 : f32 to vector<16x1xf32>
    %193 = arith.addf %189, %192 : vector<16x1xf32>
    %194 = math.rsqrt %193 : vector<16x1xf32>
    %195 = vector.broadcast %194 : vector<16x1xf32> to vector<16x32xf32>
    %196 = arith.mulf %191, %195 : vector<16x32xf32>
    %197 = vector.shape_cast %20 : vector<32xf32> to vector<1x32xf32>
    %198 = vector.broadcast %197 : vector<1x32xf32> to vector<16x32xf32>
    %199 = arith.mulf %196, %198 : vector<16x32xf32>
    %200 = vector.shape_cast %22 : vector<32xf32> to vector<1x32xf32>
    %201 = vector.broadcast %200 : vector<1x32xf32> to vector<16x32xf32>
    %202 = arith.addf %199, %201 : vector<16x32xf32>
    %c192 = arith.constant 192 : index
    %c0_51 = arith.constant 0 : index
    %203 = vector.load %arg2[%c192, %c0_51] : memref<352x128xbf16, #tpu.memory_space<vmem>>, vector<32x128xbf16>
    %204 = arith.truncf %202 : vector<16x32xf32> to vector<16x32xbf16>
    %cst_52 = arith.constant dense<0.000000e+00> : vector<16x128xf32>
    %205 = tpu.matmul %204, %203, %cst_52 {dimension_numbers = #tpu.dot_dimension_numbers<[1], [0], [0], [1], [0, 0, 1, 1], [], []>} : vector<16x32xbf16>, vector<32x128xbf16>, vector<16x128xf32> -> vector<16x128xf32>
    %206 = vector.shape_cast %10 : vector<128xf32> to vector<1x128xf32>
    %207 = vector.broadcast %206 : vector<1x128xf32> to vector<16x128xf32>
    %208 = arith.addf %205, %207 : vector<16x128xf32>
    %cst_53 = arith.constant 0.000000e+00 : f32
    %209 = vector.broadcast %cst_53 : f32 to vector<16x128xf32>
    %210 = arith.maximumf %208, %209 : vector<16x128xf32>
    %c224 = arith.constant 224 : index
    %c0_54 = arith.constant 0 : index
    %211 = vector.load %arg2[%c224, %c0_54] : memref<352x128xbf16, #tpu.memory_space<vmem>>, vector<128x32xbf16>
    %212 = arith.truncf %210 : vector<16x128xf32> to vector<16x128xbf16>
    %cst_55 = arith.constant dense<0.000000e+00> : vector<16x32xf32>
    %213 = tpu.matmul %212, %211, %cst_55 {dimension_numbers = #tpu.dot_dimension_numbers<[1], [0], [0], [1], [0, 0, 1, 1], [], []>} : vector<16x128xbf16>, vector<128x32xbf16>, vector<16x32xf32> -> vector<16x32xf32>
    %214 = vector.shape_cast %24 : vector<32xf32> to vector<1x32xf32>
    %215 = vector.broadcast %214 : vector<1x32xf32> to vector<16x32xf32>
    %216 = arith.addf %213, %215 : vector<16x32xf32>
    %217 = arith.addf %216, %202 : vector<16x32xf32>
    %cst_56 = arith.constant dense<0.000000e+00> : vector<16xf32>
    %218 = vector.multi_reduction <add>, %217, %cst_56 [1] : vector<16x32xf32> to vector<16xf32>
    %219 = vector.shape_cast %218 : vector<16xf32> to vector<16x1xf32>
    %cst_57 = arith.constant 3.200000e+01 : f32
    %220 = vector.broadcast %cst_57 : f32 to vector<16x1xf32>
    %221 = arith.divf %219, %220 : vector<16x1xf32>
    %222 = vector.broadcast %221 : vector<16x1xf32> to vector<16x32xf32>
    %223 = arith.subf %217, %222 : vector<16x32xf32>
    %224 = arith.mulf %223, %223 : vector<16x32xf32>
    %cst_58 = arith.constant dense<0.000000e+00> : vector<16xf32>
    %225 = vector.multi_reduction <add>, %224, %cst_58 [1] : vector<16x32xf32> to vector<16xf32>
    %226 = vector.shape_cast %225 : vector<16xf32> to vector<16x1xf32>
    %cst_59 = arith.constant 3.200000e+01 : f32
    %227 = vector.broadcast %cst_59 : f32 to vector<16x1xf32>
    %228 = arith.divf %226, %227 : vector<16x1xf32>
    %229 = vector.broadcast %221 : vector<16x1xf32> to vector<16x32xf32>
    %230 = arith.subf %217, %229 : vector<16x32xf32>
    %cst_60 = arith.constant 9.99999974E-6 : f32
    %231 = vector.broadcast %cst_60 : f32 to vector<16x1xf32>
    %232 = arith.addf %228, %231 : vector<16x1xf32>
    %233 = math.rsqrt %232 : vector<16x1xf32>
    %234 = vector.broadcast %233 : vector<16x1xf32> to vector<16x32xf32>
    %235 = arith.mulf %230, %234 : vector<16x32xf32>
    %236 = vector.shape_cast %26 : vector<32xf32> to vector<1x32xf32>
    %237 = vector.broadcast %236 : vector<1x32xf32> to vector<16x32xf32>
    %238 = arith.mulf %235, %237 : vector<16x32xf32>
    %239 = vector.shape_cast %28 : vector<32xf32> to vector<1x32xf32>
    %240 = vector.broadcast %239 : vector<1x32xf32> to vector<16x32xf32>
    %241 = arith.addf %238, %240 : vector<16x32xf32>
    %c0_61 = arith.constant 0 : index
    %c0_62 = arith.constant 0 : index
    %242 = vector.load %arg4[%c0_61, %c0_62] : memref<16x32xf32, #tpu.memory_space<vmem>>, vector<16x32xf32>
    tpu.vector_store %arg4[%c0_61, %c0_62], %241 {strides = array<i32>} : memref<16x32xf32, #tpu.memory_space<vmem>>, vector<16x32xf32>,
    return
  }
}

</mosaic_0001>

<llo_original>
// kernel: tpu_custom_call.1
$region0: #{tpu_custom_call.1}
  #allocation0 [shape = 'u32[]', space=smem, size = 0x4, offset = 0x4, fixed_abs, tag = 'smem constant byte address 0x4 - core index']
  #allocation1 [shape = 'u32[144,128]{1,0:T(1,128)}', space=vmem, size = 0x12000, scoped, tag = 'internal scratch']
  %s0 = inlined_call_operand.vmem [shape: f32[2,16,64], index: 0, kind: input, shape index: {}]
  %s1 = inlined_call_operand.vmem [shape: f32[2,9,8], index: 1, kind: input, shape index: {}]
  %s2 = inlined_call_operand.hbm [shape: bf16[352,128], index: 2, kind: input, shape index: {}]
  %s3 = inlined_call_operand.vmem [shape: f32[10,128], index: 3, kind: input, shape index: {}]
  %s4 = inlined_call_operand.hbm [shape: f32[16,32], index: 4, kind: output, shape index: {}]
  %s5 = sld [smem:[#allocation0]]
  $region30: #{tpu_custom_call.1} parent=0
    _
  %s7 = ssub.s32 1, %s5
  %s8 = scalar_select 0, %s7, %s5
  $region1: #{tpu_custom_call.1} parent=0
    #allocation2 [shape = 'u8[90112]{0}', space=vmem, size = 0x16000, scoped, tag = 'input window, operand 2, single buffered']
    #allocation3 [shape = 's32[1]{0}', space=sflag, size = 0x4, scoped, tag = 'scoped memory for tpu_custom_call.1']
    #allocation4 [shape = 's32[1]{0}', space=sflag, size = 0x4, scoped, tag = 'scoped memory for tpu_custom_call.1']
    #allocation5 [shape = 'u8[8192]{0}', space=vmem, size = 0x2000, scoped, tag = 'output window, operand 0, single buffered']
    %9 = vsyncpa [#allocation3], 0
    %10 = vsyncpa [#allocation4], 0
    // Predicated region
    $region2: #{tpu_custom_call.1} parent=1 // pred_check
      _
    $region3: #{tpu_custom_call.1} parent=1 // pred_check_branch
      %12 = sbr.rel (0) target = $region5
    $region4: #{tpu_custom_call.1} parent=1 // pred_region
      _
    $region5: #{tpu_custom_call.1} parent=1 // pred_fallthru
      _
    // Predicated region
    $region6: #{tpu_custom_call.1} parent=1 // pred_check
      _
    $region7: #{tpu_custom_call.1} parent=1 // pred_check_branch
      %14 = sbr.rel (0) target = $region9
    $region8: #{tpu_custom_call.1} parent=1 // pred_region
      _
    $region9: #{tpu_custom_call.1} parent=1 // pred_fallthru
      _
    // Predicated region
    $region10: #{tpu_custom_call.1} parent=1 // pred_check
      _
    $region11: #{tpu_custom_call.1} parent=1 // pred_check_branch
      %16 = sbr.rel (0) target = $region13
    $region12: #{tpu_custom_call.1} parent=1 // pred_region
      %s18 = ssub.s32 2816, 2816
      %19 = vsyncadd [#allocation3], %s18
      %s20 = sshll.u32 [#allocation2], 4
      %s21 = int_to_ptr.vmem [resolvable:$true] %s20
      %26 = dma.hbm_to_vmem [thread:$0]  %s2, 2816, %s21, [#allocation3], 64, 64, 4
    $region13: #{tpu_custom_call.1} parent=1 // pred_fallthru
      _
    // Predicated region
    $region14: #{tpu_custom_call.1} parent=1 // pred_check
      _
    $region15: #{tpu_custom_call.1} parent=1 // pred_check_branch
      %28 = sbr.rel (0) target = $region17
    $region16: #{tpu_custom_call.1} parent=1 // pred_region
      _
    $region17: #{tpu_custom_call.1} parent=1 // pred_fallthru
      _
    // Predicated region
    $region18: #{tpu_custom_call.1} parent=1 // pred_check
      _
    $region19: #{tpu_custom_call.1} parent=1 // pred_check_branch
      %30 = sbr.rel (0) target = $region21
    $region20: #{tpu_custom_call.1} parent=1 // pred_region
      %31 = dma.done [#allocation3], 2816
    $region21: #{tpu_custom_call.1} parent=1 // pred_fallthru
      _
    %v33 = vld [vmem:[%s0] sm:$0xff]
    %v34 = vld [vmem:[%s0 + $0x8] sm:$0xff]
    %v35 = vld [vmem:[%s0 + $0x10] sm:$0xff]
    %v36 = vld [vmem:[%s0 + $0x18] sm:$0xff]
    %v37 = vld [vmem:[%s1] sm:$0xff]
    %v38 = vld [vmem:[%s1 + $0x8] sm:$0x1]
    %v39 = vld [vmem:[%s1 + $0x10] sm:$0xff]
    %v40 = vld [vmem:[%s1 + $0x18] sm:$0x1]
    %v41 = vld [vmem:[%s3] sm:$0xff]
    %v42 = vld [vmem:[%s3 + $0x8] sm:$0x3]
    %v43 = vld [vmem:[#allocation2] sm:$0xf]
    %v44 = vld [vmem:[#allocation2 + $0x4] sm:$0xf]
    %v45 = vld [vmem:[#allocation2 + $0x8] sm:$0xf]
    %v46 = vld [vmem:[#allocation2 + $0xc] sm:$0xf]
    %v47 = vpack.c.bf16 %v35, %v33
    %v52 = vunpack.c.l.b16 %v43
    %v53 = vunpack.c.l.b16 %v44
    %v54 = vunpack.c.l.b16 %v45
    %v55 = vunpack.c.l.b16 %v46
    %v56 = vpack.c.b16 %v53, %v52
    %v57 = vpack.c.b16 %v55, %v54
    %vm60 = vcmask 261120
    %v62 = vsel %vm60, %v47, 0
    %64 = vmatprep.subr.bf16.mxu0 0
    %65 = vmatpush1.bf16.msra.mxu0 0
    %66 = vmatprep.subr.bf16.mxu0 0
    %67 = vmatpush1.bf16.msra.mxu0 0
    %68 = vmatprep.subr.bf16.mxu0 0
    %69 = vmatpush1.bf16.msra.mxu0 0
    %70 = vmatprep.subr.bf16.mxu0 0
    %71 = vmatpush1.bf16.msra.mxu0 0
    %72 = vmatprep.subr.bf16.mxu0 0
    %73 = vmatpush1.bf16.msra.mxu0 0
    %74 = vmatprep.subr.bf16.mxu0 0
    %75 = vmatpush1.bf16.msra.mxu0 0
    %76 = vmatprep.subr.bf16.mxu0 0
    %77 = vmatpush1.bf16.msra.mxu0 %v57
    %78 = vmatprep.subr.bf16.mxu0 0
    %79 = vmatpush1.bf16.msra.mxu0 %v56
    %80 = vmatprep.subr.bf16.mxu0 0
    %81 = vmatpush2.bf16.msra.mxu0 0
    %82 = vmatprep.subr.bf16.mxu0 0
    %83 = vmatpush2.bf16.msra.mxu0 0
    %84 = vmatprep.subr.bf16.mxu0 0
    %85 = vmatpush2.bf16.msra.mxu0 0
    %86 = vmatprep.subr.bf16.mxu0 0
    %87 = vmatpush2.bf16.msra.mxu0 0
    %88 = vmatprep.subr.bf16.mxu0 0
    %89 = vmatpush2.bf16.msra.mxu0 0
    %90 = vmatprep.subr.bf16.mxu0 0
    %91 = vmatpush2.bf16.msra.mxu0 0
    %92 = vmatprep.subr.bf16.mxu0 0
    %93 = vmatpush2.bf16.msra.mxu0 0
    %94 = vmatprep.subr.bf16.mxu0 0
    %95 = vmatpush2.bf16.msra.mxu0 0
    %96 = vmatprep.mubr.bf16.mxu0 0
    %97 = vmatmul.mubr.bf16.gmra.mxu0 %v62
    %v98 = vpop.f32.mrf.mxu0
    %v99 = vadd.f32 0.0, %v98
    %v100 = vpop.f32.mrf.mxu0
    %v101 = vpop.f32.mrf.mxu0
    %v102 = vadd.f32 0.0, %v101
    %v103 = vpop.f32.mrf.mxu0
    %104 = vdwg.mxu0
    %106 = vrot.lane.b32.xlu0 %v99, 96
    %v107 = vpop.permute.xlu0 %106
    %vm108 = vcmask 130048
    %v109 = vsel %vm108, %v99, 0
    %v111 = vsel %vm108, %v107, 0
    %113 = vmatprep.subr.mxu0 0.0
    %114 = vmatpush1.xpose.msra.mxu0 0.0
    %115 = vmatprep.subr.mxu0 0.0
    %116 = vmatpush1.xpose.msra.mxu0 0.0
    %117 = vmatprep.subr.mxu0 0.0
    %118 = vmatpush1.xpose.msra.mxu0 0.0
    %119 = vmatprep.subr.mxu0 0.0
    %120 = vmatpush1.xpose.msra.mxu0 0.0
    %121 = vmatprep.subr.mxu0 0.0
    %122 = vmatpush1.xpose.msra.mxu0 0.0
    %123 = vmatprep.subr.mxu0 0.0
    %124 = vmatpush1.xpose.msra.mxu0 0.0
    %125 = vmatprep.subr.mxu0 0.0
    %126 = vmatpush1.xpose.msra.mxu0 0.0
    %127 = vmatprep.subr.mxu0 0.0
    %128 = vmatpush1.xpose.msra.mxu0 0.0
    %129 = vmatprep.subr.mxu0 0.0
    %130 = vmatpush1.xpose.msra.mxu0 0.0
    %131 = vmatprep.subr.mxu0 0.0
    %132 = vmatpush1.xpose.msra.mxu0 0.0
    %133 = vmatprep.subr.mxu0 0.0
    %134 = vmatpush1.xpose.msra.mxu0 0.0
    %135 = vmatprep.subr.mxu0 0.0
    %136 = vmatpush1.xpose.msra.mxu0 0.0
    %137 = vmatprep.subr.mxu0 0.0
    %138 = vmatpush1.xpose.msra.mxu0 0.0
    %139 = vmatprep.subr.mxu0 0.0
    %140 = vmatpush1.xpose.msra.mxu0 0.0
    %141 = vmatprep.subr.mxu0 0.0
    %142 = vmatpush1.xpose.msra.mxu0 0.0
    %143 = vmatprep.subr.mxu0 0.0
    %144 = vmatpush1.xpose.msra.mxu0 %v111
    %145 = vmatprep.subr.mxu0 0.0
    %146 = vmatpush2.xpose.msra.mxu0 0.0
    %147 = vmatprep.subr.mxu0 0.0
    %148 = vmatpush2.xpose.msra.mxu0 0.0
    %149 = vmatprep.subr.mxu0 0.0
    %150 = vmatpush2.xpose.msra.mxu0 0.0
    %151 = vmatprep.subr.mxu0 0.0
    %152 = vmatpush2.xpose.msra.mxu0 0.0
    %153 = vmatprep.subr.mxu0 0.0
    %154 = vmatpush2.xpose.msra.mxu0 0.0
    %155 = vmatprep.subr.mxu0 0.0
    %156 = vmatpush2.xpose.msra.mxu0 0.0
    %157 = vmatprep.subr.mxu0 0.0
    %158 = vmatpush2.xpose.msra.mxu0 0.0
    %159 = vmatprep.subr.mxu0 0.0
    %160 = vmatpush2.xpose.msra.mxu0 0.0
    %161 = vmatprep.subr.mxu0 0.0
    %162 = vmatpush2.xpose.msra.mxu0 0.0
    %163 = vmatprep.subr.mxu0 0.0
    %164 = vmatpush2.xpose.msra.mxu0 0.0
    %165 = vmatprep.subr.mxu0 0.0
    %166 = vmatpush2.xpose.msra.mxu0 0.0
    %167 = vmatprep.subr.mxu0 0.0
    %168 = vmatpush2.xpose.msra.mxu0 0.0
    %169 = vmatprep.subr.mxu0 0.0
    %170 = vmatpush2.xpose.msra.mxu0 0.0
    %171 = vmatprep.subr.mxu0 0.0
    %172 = vmatpush2.xpose.msra.mxu0 0.0
    %173 = vmatprep.subr.mxu0 0.0
    %174 = vmatpush2.xpose.msra.mxu0 0.0
    %175 = vmatprep.subr.mxu0 0.0
    %176 = vmatpush2.xpose.msra.mxu0 0.0
    %177 = vmatprep.mubr.f32.mxu0 0.0
    %178 = vmatmul.mubr.f32.gmra.mxu0 %v109
    %v179 = vpop.f32.mrf.mxu0
    %v180 = vadd.f32 0.0, %v179
    %v181 = vpop.f32.mrf.mxu0
    %182 = vdwg.mxu0
    %184 = vrot.lane.b32.xlu0 %v102, 96
    %v185 = vpop.permute.xlu0 %184
    %v186 = vsel %vm108, %v102, 0
    %v188 = vsel %vm108, %v185, 0
    %190 = vmatprep.subr.mxu0 0.0
    %191 = vmatpush1.xpose.msra.mxu0 0.0
    %192 = vmatprep.subr.mxu0 0.0
    %193 = vmatpush1.xpose.msra.mxu0 0.0
    %194 = vmatprep.subr.mxu0 0.0
    %195 = vmatpush1.xpose.msra.mxu0 0.0
    %196 = vmatprep.subr.mxu0 0.0
    %197 = vmatpush1.xpose.msra.mxu0 0.0
    %198 = vmatprep.subr.mxu0 0.0
    %199 = vmatpush1.xpose.msra.mxu0 0.0
    %200 = vmatprep.subr.mxu0 0.0
    %201 = vmatpush1.xpose.msra.mxu0 0.0
    %202 = vmatprep.subr.mxu0 0.0
    %203 = vmatpush1.xpose.msra.mxu0 0.0
    %204 = vmatprep.subr.mxu0 0.0
    %205 = vmatpush1.xpose.msra.mxu0 0.0
    %206 = vmatprep.subr.mxu0 0.0
    %207 = vmatpush1.xpose.msra.mxu0 0.0
    %208 = vmatprep.subr.mxu0 0.0
    %209 = vmatpush1.xpose.msra.mxu0 0.0
    %210 = vmatprep.subr.mxu0 0.0
    %211 = vmatpush1.xpose.msra.mxu0 0.0
    %212 = vmatprep.subr.mxu0 0.0
    %213 = vmatpush1.xpose.msra.mxu0 0.0
    %214 = vmatprep.subr.mxu0 0.0
    %215 = vmatpush1.xpose.msra.mxu0 0.0
    %216 = vmatprep.subr.mxu0 0.0
    %217 = vmatpush1.xpose.msra.mxu0 0.0
    %218 = vmatprep.subr.mxu0 0.0
    %219 = vmatpush1.xpose.msra.mxu0 0.0
    %220 = vmatprep.subr.mxu0 0.0
    %221 = vmatpush1.xpose.msra.mxu0 %v188
    %222 = vmatprep.subr.mxu0 0.0
    %223 = vmatpush2.xpose.msra.mxu0 0.0
    %224 = vmatprep.subr.mxu0 0.0
    %225 = vmatpush2.xpose.msra.mxu0 0.0
    %226 = vmatprep.subr.mxu0 0.0
    %227 = vmatpush2.xpose.msra.mxu0 0.0
    %228 = vmatprep.subr.mxu0 0.0
    %229 = vmatpush2.xpose.msra.mxu0 0.0
    %230 = vmatprep.subr.mxu0 0.0
    %231 = vmatpush2.xpose.msra.mxu0 0.0
    %232 = vmatprep.subr.mxu0 0.0
    %233 = vmatpush2.xpose.msra.mxu0 0.0
    %234 = vmatprep.subr.mxu0 0.0
    %235 = vmatpush2.xpose.msra.mxu0 0.0
    %236 = vmatprep.subr.mxu0 0.0
    %237 = vmatpush2.xpose.msra.mxu0 0.0
    %238 = vmatprep.subr.mxu0 0.0
    %239 = vmatpush2.xpose.msra.mxu0 0.0
    %240 = vmatprep.subr.mxu0 0.0
    %241 = vmatpush2.xpose.msra.mxu0 0.0
    %242 = vmatprep.subr.mxu0 0.0
    %243 = vmatpush2.xpose.msra.mxu0 0.0
    %244 = vmatprep.subr.mxu0 0.0
    %245 = vmatpush2.xpose.msra.mxu0 0.0
    %246 = vmatprep.subr.mxu0 0.0
    %247 = vmatpush2.xpose.msra.mxu0 0.0
    %248 = vmatprep.subr.mxu0 0.0
    %249 = vmatpush2.xpose.msra.mxu0 0.0
    %250 = vmatprep.subr.mxu0 0.0
    %251 = vmatpush2.xpose.msra.mxu0 0.0
    %252 = vmatprep.subr.mxu0 0.0
    %253 = vmatpush2.xpose.msra.mxu0 0.0
    %254 = vmatprep.mubr.f32.mxu0 0.0
    %255 = vmatmul.mubr.f32.gmra.mxu0 %v186
    %v256 = vpop.f32.mrf.mxu0
    %v257 = vadd.f32 0.0, %v256
    %v258 = vpop.f32.mrf.mxu0
    %259 = vdwg.mxu0
    %vm260 = vcmp.eq.f32.partialorder %v37, 0.0
    %vm261 = vcmp.eq.f32.partialorder %v39, 0.0
    %v262 = vsel %vm260, -1e+20, %v180
    %v263 = vsel %vm261, -1e+20, %v257
    %vm264 = vcmask 64512
    %v265 = vsel %vm264, %v262, -inf
    %266 = vmax.xlane.f32.xlu0 %v265
    %v267 = vpop.xlane.xlu0 %266
    %v268 = vsel %vm264, %v263, -inf
    %269 = vmax.xlane.f32.xlu0 %v268
    %v270 = vpop.xlane.xlu0 %269
    %v271 = vsub.f32 %v262, %v267
    %v272 = vsub.f32 %v263, %v270
    %v273 = vmul.f32 %v271, 1.442695
    %v274 = vpow.pop %v273
    %v275 = vmul.f32 %v272, 1.442695
    %v276 = vpow.pop %v275
    %v277 = vsel %vm264, %v274, 0.0
    %278 = vadd.xlane.f32.xlu0 %v277
    %v279 = vpop.xlane.xlu0 %278
    %v280 = vsel %vm264, %v276, 0.0
    %281 = vadd.xlane.f32.xlu0 %v280
    %v282 = vpop.xlane.xlu0 %281
    %v283 = vrcp.pop %v279
    %v284 = vrcp.pop %v282
    %v285 = vmul.f32 %v274, %v283
    %v286 = vmul.f32 %v276, %v284
    %287 = vrot.lane.b32.xlu0 %v99, 64
    %v288 = vpop.permute.xlu0 %287
    %v291 = vsel %vm264, %v285, 0
    %293 = vmatprep.subr.mxu0 0.0
    %294 = vmatpush1.msra.mxu0 0.0
    %295 = vmatprep.subr.mxu0 0.0
    %296 = vmatpush1.msra.mxu0 0.0
    %297 = vmatprep.subr.mxu0 0.0
    %298 = vmatpush1.msra.mxu0 0.0
    %299 = vmatprep.subr.mxu0 0.0
    %300 = vmatpush1.msra.mxu0 0.0
    %301 = vmatprep.subr.mxu0 0.0
    %302 = vmatpush1.msra.mxu0 0.0
    %303 = vmatprep.subr.mxu0 0.0
    %304 = vmatpush1.msra.mxu0 0.0
    %305 = vmatprep.subr.mxu0 0.0
    %306 = vmatpush1.msra.mxu0 0.0
    %307 = vmatprep.subr.mxu0 0.0
    %308 = vmatpush1.msra.mxu0 0.0
    %309 = vmatprep.subr.mxu0 0.0
    %310 = vmatpush1.msra.mxu0 0.0
    %311 = vmatprep.subr.mxu0 0.0
    %312 = vmatpush1.msra.mxu0 0.0
    %313 = vmatprep.subr.mxu0 0.0
    %314 = vmatpush1.msra.mxu0 0.0
    %315 = vmatprep.subr.mxu0 0.0
    %316 = vmatpush1.msra.mxu0 0.0
    %317 = vmatprep.subr.mxu0 0.0
    %318 = vmatpush1.msra.mxu0 0.0
    %319 = vmatprep.subr.mxu0 0.0
    %320 = vmatpush1.msra.mxu0 0.0
    %321 = vmatprep.subr.mxu0 0.0
    %322 = vmatpush1.msra.mxu0 0.0
    %323 = vmatprep.subr.mxu0 0.0
    %324 = vmatpush1.msra.mxu0 %v288
    %325 = vmatprep.subr.mxu0 0.0
    %326 = vmatpush2.msra.mxu0 0.0
    %327 = vmatprep.subr.mxu0 0.0
    %328 = vmatpush2.msra.mxu0 0.0
    %329 = vmatprep.subr.mxu0 0.0
    %330 = vmatpush2.msra.mxu0 0.0
    %331 = vmatprep.subr.mxu0 0.0
    %332 = vmatpush2.msra.mxu0 0.0
    %333 = vmatprep.subr.mxu0 0.0
    %334 = vmatpush2.msra.mxu0 0.0
    %335 = vmatprep.subr.mxu0 0.0
    %336 = vmatpush2.msra.mxu0 0.0
    %337 = vmatprep.subr.mxu0 0.0
    %338 = vmatpush2.msra.mxu0 0.0
    %339 = vmatprep.subr.mxu0 0.0
    %340 = vmatpush2.msra.mxu0 0.0
    %341 = vmatprep.subr.mxu0 0.0
    %342 = vmatpush2.msra.mxu0 0.0
    %343 = vmatprep.subr.mxu0 0.0
    %344 = vmatpush2.msra.mxu0 0.0
    %345 = vmatprep.subr.mxu0 0.0
    %346 = vmatpush2.msra.mxu0 0.0
    %347 = vmatprep.subr.mxu0 0.0
    %348 = vmatpush2.msra.mxu0 0.0
    %349 = vmatprep.subr.mxu0 0.0
    %350 = vmatpush2.msra.mxu0 0.0
    %351 = vmatprep.subr.mxu0 0.0
    %352 = vmatpush2.msra.mxu0 0.0
    %353 = vmatprep.subr.mxu0 0.0
    %354 = vmatpush2.msra.mxu0 0.0
    %355 = vmatprep.subr.mxu0 0.0
    %356 = vmatpush2.msra.mxu0 0.0
    %357 = vmatprep.mubr.f32.mxu0 0.0
    %358 = vmatmul.mubr.f32.gmra.mxu0 %v291
    %v359 = vpop.f32.mrf.mxu0
    %v360 = vadd.f32 0.0, %v359
    %v361 = vpop.f32.mrf.mxu0
    %362 = vdwg.mxu0
    %363 = vrot.lane.b32.xlu0 %v102, 64
    %v364 = vpop.permute.xlu0 %363
    %v367 = vsel %vm264, %v286, 0
    %369 = vmatprep.subr.mxu0 0.0
    %370 = vmatpush1.msra.mxu0 0.0
    %371 = vmatprep.subr.mxu0 0.0
    %372 = vmatpush1.msra.mxu0 0.0
    %373 = vmatprep.subr.mxu0 0.0
    %374 = vmatpush1.msra.mxu0 0.0
    %375 = vmatprep.subr.mxu0 0.0
    %376 = vmatpush1.msra.mxu0 0.0
    %377 = vmatprep.subr.mxu0 0.0
    %378 = vmatpush1.msra.mxu0 0.0
    %379 = vmatprep.subr.mxu0 0.0
    %380 = vmatpush1.msra.mxu0 0.0
    %381 = vmatprep.subr.mxu0 0.0
    %382 = vmatpush1.msra.mxu0 0.0
    %383 = vmatprep.subr.mxu0 0.0
    %384 = vmatpush1.msra.mxu0 0.0
    %385 = vmatprep.subr.mxu0 0.0
    %386 = vmatpush1.msra.mxu0 0.0
    %387 = vmatprep.subr.mxu0 0.0
    %388 = vmatpush1.msra.mxu0 0.0
    %389 = vmatprep.subr.mxu0 0.0
    %390 = vmatpush1.msra.mxu0 0.0
    %391 = vmatprep.subr.mxu0 0.0
    %392 = vmatpush1.msra.mxu0 0.0
    %393 = vmatprep.subr.mxu0 0.0
    %394 = vmatpush1.msra.mxu0 0.0
    %395 = vmatprep.subr.mxu0 0.0
    %396 = vmatpush1.msra.mxu0 0.0
    %397 = vmatprep.subr.mxu0 0.0
    %398 = vmatpush1.msra.mxu0 0.0
    %399 = vmatprep.subr.mxu0 0.0
    %400 = vmatpush1.msra.mxu0 %v364
    %401 = vmatprep.subr.mxu0 0.0
    %402 = vmatpush2.msra.mxu0 0.0
    %403 = vmatprep.subr.mxu0 0.0
    %404 = vmatpush2.msra.mxu0 0.0
    %405 = vmatprep.subr.mxu0 0.0
    %406 = vmatpush2.msra.mxu0 0.0
    %407 = vmatprep.subr.mxu0 0.0
    %408 = vmatpush2.msra.mxu0 0.0
    %409 = vmatprep.subr.mxu0 0.0
    %410 = vmatpush2.msra.mxu0 0.0
    %411 = vmatprep.subr.mxu0 0.0
    %412 = vmatpush2.msra.mxu0 0.0
    %413 = vmatprep.subr.mxu0 0.0
    %414 = vmatpush2.msra.mxu0 0.0
    %415 = vmatprep.subr.mxu0 0.0
    %416 = vmatpush2.msra.mxu0 0.0
    %417 = vmatprep.subr.mxu0 0.0
    %418 = vmatpush2.msra.mxu0 0.0
    %419 = vmatprep.subr.mxu0 0.0
    %420 = vmatpush2.msra.mxu0 0.0
    %421 = vmatprep.subr.mxu0 0.0
    %422 = vmatpush2.msra.mxu0 0.0
    %423 = vmatprep.subr.mxu0 0.0
    %424 = vmatpush2.msra.mxu0 0.0
    %425 = vmatprep.subr.mxu0 0.0
    %426 = vmatpush2.msra.mxu0 0.0
    %427 = vmatprep.subr.mxu0 0.0
    %428 = vmatpush2.msra.mxu0 0.0
    %429 = vmatprep.subr.mxu0 0.0
    %430 = vmatpush2.msra.mxu0 0.0
    %431 = vmatprep.subr.mxu0 0.0
    %432 = vmatpush2.msra.mxu0 0.0
    %433 = vmatprep.mubr.f32.mxu0 0.0
    %434 = vmatmul.mubr.f32.gmra.mxu0 %v367
    %v435 = vpop.f32.mrf.mxu0
    %v436 = vadd.f32 0.0, %v435
    %v437 = vpop.f32.mrf.mxu0
    %438 = vdwg.mxu0
    %439 = vrot.lane.b32.xlu0 %v99, 112
    %v440 = vpop.permute.xlu0 %439
    %441 = vrot.lane.b32.xlu0 %v99, 80
    %v442 = vpop.permute.xlu0 %441
    %v443 = vsel %vm108, %v440, 0
    %v445 = vsel %vm108, %v442, 0
    %447 = vmatprep.subr.mxu0 0.0
    %448 = vmatpush1.xpose.msra.mxu0 0.0
    %449 = vmatprep.subr.mxu0 0.0
    %450 = vmatpush1.xpose.msra.mxu0 0.0
    %451 = vmatprep.subr.mxu0 0.0
    %452 = vmatpush1.xpose.msra.mxu0 0.0
    %453 = vmatprep.subr.mxu0 0.0
    %454 = vmatpush1.xpose.msra.mxu0 0.0
    %455 = vmatprep.subr.mxu0 0.0
    %456 = vmatpush1.xpose.msra.mxu0 0.0
    %457 = vmatprep.subr.mxu0 0.0
    %458 = vmatpush1.xpose.msra.mxu0 0.0
    %459 = vmatprep.subr.mxu0 0.0
    %460 = vmatpush1.xpose.msra.mxu0 0.0
    %461 = vmatprep.subr.mxu0 0.0
    %462 = vmatpush1.xpose.msra.mxu0 0.0
    %463 = vmatprep.subr.mxu0 0.0
    %464 = vmatpush1.xpose.msra.mxu0 0.0
    %465 = vmatprep.subr.mxu0 0.0
    %466 = vmatpush1.xpose.msra.mxu0 0.0
    %467 = vmatprep.subr.mxu0 0.0
    %468 = vmatpush1.xpose.msra.mxu0 0.0
    %469 = vmatprep.subr.mxu0 0.0
    %470 = vmatpush1.xpose.msra.mxu0 0.0
    %471 = vmatprep.subr.mxu0 0.0
    %472 = vmatpush1.xpose.msra.mxu0 0.0
    %473 = vmatprep.subr.mxu0 0.0
    %474 = vmatpush1.xpose.msra.mxu0 0.0
    %475 = vmatprep.subr.mxu0 0.0
    %476 = vmatpush1.xpose.msra.mxu0 0.0
    %477 = vmatprep.subr.mxu0 0.0
    %478 = vmatpush1.xpose.msra.mxu0 %v445
    %479 = vmatprep.subr.mxu0 0.0
    %480 = vmatpush2.xpose.msra.mxu0 0.0
    %481 = vmatprep.subr.mxu0 0.0
    %482 = vmatpush2.xpose.msra.mxu0 0.0
    %483 = vmatprep.subr.mxu0 0.0
    %484 = vmatpush2.xpose.msra.mxu0 0.0
    %485 = vmatprep.subr.mxu0 0.0
    %486 = vmatpush2.xpose.msra.mxu0 0.0
    %487 = vmatprep.subr.mxu0 0.0
    %488 = vmatpush2.xpose.msra.mxu0 0.0
    %489 = vmatprep.subr.mxu0 0.0
    %490 = vmatpush2.xpose.msra.mxu0 0.0
    %491 = vmatprep.subr.mxu0 0.0
    %492 = vmatpush2.xpose.msra.mxu0 0.0
    %493 = vmatprep.subr.mxu0 0.0
    %494 = vmatpush2.xpose.msra.mxu0 0.0
    %495 = vmatprep.subr.mxu0 0.0
    %496 = vmatpush2.xpose.msra.mxu0 0.0
    %497 = vmatprep.subr.mxu0 0.0
    %498 = vmatpush2.xpose.msra.mxu0 0.0
    %499 = vmatprep.subr.mxu0 0.0
    %500 = vmatpush2.xpose.msra.mxu0 0.0
    %501 = vmatprep.subr.mxu0 0.0
    %502 = vmatpush2.xpose.msra.mxu0 0.0
    %503 = vmatprep.subr.mxu0 0.0
    %504 = vmatpush2.xpose.msra.mxu0 0.0
    %505 = vmatprep.subr.mxu0 0.0
    %506 = vmatpush2.xpose.msra.mxu0 0.0
    %507 = vmatprep.subr.mxu0 0.0
    %508 = vmatpush2.xpose.msra.mxu0 0.0
    %509 = vmatprep.subr.mxu0 0.0
    %510 = vmatpush2.xpose.msra.mxu0 0.0
    %511 = vmatprep.mubr.f32.mxu0 0.0
    %512 = vmatmul.mubr.f32.gmra.mxu0 %v443
    %v513 = vpop.f32.mrf.mxu0
    %v514 = vadd.f32 0.0, %v513
    %v515 = vpop.f32.mrf.mxu0
    %516 = vdwg.mxu0
    %517 = vrot.lane.b32.xlu0 %v102, 112
    %v518 = vpop.permute.xlu0 %517
    %519 = vrot.lane.b32.xlu0 %v102, 80
    %v520 = vpop.permute.xlu0 %519
    %v521 = vsel %vm108, %v518, 0
    %v523 = vsel %vm108, %v520, 0
    %525 = vmatprep.subr.mxu0 0.0
    %526 = vmatpush1.xpose.msra.mxu0 0.0
    %527 = vmatprep.subr.mxu0 0.0
    %528 = vmatpush1.xpose.msra.mxu0 0.0
    %529 = vmatprep.subr.mxu0 0.0
    %530 = vmatpush1.xpose.msra.mxu0 0.0
    %531 = vmatprep.subr.mxu0 0.0
    %532 = vmatpush1.xpose.msra.mxu0 0.0
    %533 = vmatprep.subr.mxu0 0.0
    %534 = vmatpush1.xpose.msra.mxu0 0.0
    %535 = vmatprep.subr.mxu0 0.0
    %536 = vmatpush1.xpose.msra.mxu0 0.0
    %537 = vmatprep.subr.mxu0 0.0
    %538 = vmatpush1.xpose.msra.mxu0 0.0
    %539 = vmatprep.subr.mxu0 0.0
    %540 = vmatpush1.xpose.msra.mxu0 0.0
    %541 = vmatprep.subr.mxu0 0.0
    %542 = vmatpush1.xpose.msra.mxu0 0.0
    %543 = vmatprep.subr.mxu0 0.0
    %544 = vmatpush1.xpose.msra.mxu0 0.0
    %545 = vmatprep.subr.mxu0 0.0
    %546 = vmatpush1.xpose.msra.mxu0 0.0
    %547 = vmatprep.subr.mxu0 0.0
    %548 = vmatpush1.xpose.msra.mxu0 0.0
    %549 = vmatprep.subr.mxu0 0.0
    %550 = vmatpush1.xpose.msra.mxu0 0.0
    %551 = vmatprep.subr.mxu0 0.0
    %552 = vmatpush1.xpose.msra.mxu0 0.0
    %553 = vmatprep.subr.mxu0 0.0
    %554 = vmatpush1.xpose.msra.mxu0 0.0
    %555 = vmatprep.subr.mxu0 0.0
    %556 = vmatpush1.xpose.msra.mxu0 %v523
    %557 = vmatprep.subr.mxu0 0.0
    %558 = vmatpush2.xpose.msra.mxu0 0.0
    %559 = vmatprep.subr.mxu0 0.0
    %560 = vmatpush2.xpose.msra.mxu0 0.0
    %561 = vmatprep.subr.mxu0 0.0
    %562 = vmatpush2.xpose.msra.mxu0 0.0
    %563 = vmatprep.subr.mxu0 0.0
    %564 = vmatpush2.xpose.msra.mxu0 0.0
    %565 = vmatprep.subr.mxu0 0.0
    %566 = vmatpush2.xpose.msra.mxu0 0.0
    %567 = vmatprep.subr.mxu0 0.0
    %568 = vmatpush2.xpose.msra.mxu0 0.0
    %569 = vmatprep.subr.mxu0 0.0
    %570 = vmatpush2.xpose.msra.mxu0 0.0
    %571 = vmatprep.subr.mxu0 0.0
    %572 = vmatpush2.xpose.msra.mxu0 0.0
    %573 = vmatprep.subr.mxu0 0.0
    %574 = vmatpush2.xpose.msra.mxu0 0.0
    %575 = vmatprep.subr.mxu0 0.0
    %576 = vmatpush2.xpose.msra.mxu0 0.0
    %577 = vmatprep.subr.mxu0 0.0
    %578 = vmatpush2.xpose.msra.mxu0 0.0
    %579 = vmatprep.subr.mxu0 0.0
    %580 = vmatpush2.xpose.msra.mxu0 0.0
    %581 = vmatprep.subr.mxu0 0.0
    %582 = vmatpush2.xpose.msra.mxu0 0.0
    %583 = vmatprep.subr.mxu0 0.0
    %584 = vmatpush2.xpose.msra.mxu0 0.0
    %585 = vmatprep.subr.mxu0 0.0
    %586 = vmatpush2.xpose.msra.mxu0 0.0
    %587 = vmatprep.subr.mxu0 0.0
    %588 = vmatpush2.xpose.msra.mxu0 0.0
    %589 = vmatprep.mubr.f32.mxu0 0.0
    %590 = vmatmul.mubr.f32.gmra.mxu0 %v521
    %v591 = vpop.f32.mrf.mxu0
    %v592 = vadd.f32 0.0, %v591
    %v593 = vpop.f32.mrf.mxu0
    %594 = vdwg.mxu0
    %v595 = vsel %vm260, -1e+20, %v514
    %v596 = vsel %vm261, -1e+20, %v592
    %v597 = vsel %vm264, %v595, -inf
    %598 = vmax.xlane.f32.xlu0 %v597
    %v599 = vpop.xlane.xlu0 %598
    %v600 = vsel %vm264, %v596, -inf
    %601 = vmax.xlane.f32.xlu0 %v600
    %v602 = vpop.xlane.xlu0 %601
    %v603 = vsub.f32 %v595, %v599
    %v604 = vsub.f32 %v596, %v602
    %v605 = vmul.f32 %v603, 1.442695
    %v606 = vpow.pop %v605
    %v607 = vmul.f32 %v604, 1.442695
    %v608 = vpow.pop %v607
    %v609 = vsel %vm264, %v606, 0.0
    %610 = vadd.xlane.f32.xlu0 %v609
    %v611 = vpop.xlane.xlu0 %610
    %v612 = vsel %vm264, %v608, 0.0
    %613 = vadd.xlane.f32.xlu0 %v612
    %v614 = vpop.xlane.xlu0 %613
    %v615 = vrcp.pop %v611
    %v616 = vrcp.pop %v614
    %v617 = vmul.f32 %v606, %v615
    %v618 = vmul.f32 %v608, %v616
    %619 = vrot.lane.b32.xlu0 %v99, 48
    %v620 = vpop.permute.xlu0 %619
    %v623 = vsel %vm264, %v617, 0
    %625 = vmatprep.subr.mxu0 0.0
    %626 = vmatpush1.msra.mxu0 0.0
    %627 = vmatprep.subr.mxu0 0.0
    %628 = vmatpush1.msra.mxu0 0.0
    %629 = vmatprep.subr.mxu0 0.0
    %630 = vmatpush1.msra.mxu0 0.0
    %631 = vmatprep.subr.mxu0 0.0
    %632 = vmatpush1.msra.mxu0 0.0
    %633 = vmatprep.subr.mxu0 0.0
    %634 = vmatpush1.msra.mxu0 0.0
    %635 = vmatprep.subr.mxu0 0.0
    %636 = vmatpush1.msra.mxu0 0.0
    %637 = vmatprep.subr.mxu0 0.0
    %638 = vmatpush1.msra.mxu0 0.0
    %639 = vmatprep.subr.mxu0 0.0
    %640 = vmatpush1.msra.mxu0 0.0
    %641 = vmatprep.subr.mxu0 0.0
    %642 = vmatpush1.msra.mxu0 0.0
    %643 = vmatprep.subr.mxu0 0.0
    %644 = vmatpush1.msra.mxu0 0.0
    %645 = vmatprep.subr.mxu0 0.0
    %646 = vmatpush1.msra.mxu0 0.0
    %647 = vmatprep.subr.mxu0 0.0
    %648 = vmatpush1.msra.mxu0 0.0
    %649 = vmatprep.subr.mxu0 0.0
    %650 = vmatpush1.msra.mxu0 0.0
    %651 = vmatprep.subr.mxu0 0.0
    %652 = vmatpush1.msra.mxu0 0.0
    %653 = vmatprep.subr.mxu0 0.0
    %654 = vmatpush1.msra.mxu0 0.0
    %655 = vmatprep.subr.mxu0 0.0
    %656 = vmatpush1.msra.mxu0 %v620
    %657 = vmatprep.subr.mxu0 0.0
    %658 = vmatpush2.msra.mxu0 0.0
    %659 = vmatprep.subr.mxu0 0.0
    %660 = vmatpush2.msra.mxu0 0.0
    %661 = vmatprep.subr.mxu0 0.0
    %662 = vmatpush2.msra.mxu0 0.0
    %663 = vmatprep.subr.mxu0 0.0
    %664 = vmatpush2.msra.mxu0 0.0
    %665 = vmatprep.subr.mxu0 0.0
    %666 = vmatpush2.msra.mxu0 0.0
    %667 = vmatprep.subr.mxu0 0.0
    %668 = vmatpush2.msra.mxu0 0.0
    %669 = vmatprep.subr.mxu0 0.0
    %670 = vmatpush2.msra.mxu0 0.0
    %671 = vmatprep.subr.mxu0 0.0
    %672 = vmatpush2.msra.mxu0 0.0
    %673 = vmatprep.subr.mxu0 0.0
    %674 = vmatpush2.msra.mxu0 0.0
    %675 = vmatprep.subr.mxu0 0.0
    %676 = vmatpush2.msra.mxu0 0.0
    %677 = vmatprep.subr.mxu0 0.0
    %678 = vmatpush2.msra.mxu0 0.0
    %679 = vmatprep.subr.mxu0 0.0
    %680 = vmatpush2.msra.mxu0 0.0
    %681 = vmatprep.subr.mxu0 0.0
    %682 = vmatpush2.msra.mxu0 0.0
    %683 = vmatprep.subr.mxu0 0.0
    %684 = vmatpush2.msra.mxu0 0.0
    %685 = vmatprep.subr.mxu0 0.0
    %686 = vmatpush2.msra.mxu0 0.0
    %687 = vmatprep.subr.mxu0 0.0
    %688 = vmatpush2.msra.mxu0 0.0
    %689 = vmatprep.mubr.f32.mxu0 0.0
    %690 = vmatmul.mubr.f32.gmra.mxu0 %v623
    %v691 = vpop.f32.mrf.mxu0
    %v692 = vadd.f32 0.0, %v691
    %v693 = vpop.f32.mrf.mxu0
    %694 = vdwg.mxu0
    %695 = vrot.lane.b32.xlu0 %v102, 48
    %v696 = vpop.permute.xlu0 %695
    %v699 = vsel %vm264, %v618, 0
    %701 = vmatprep.subr.mxu0 0.0
    %702 = vmatpush1.msra.mxu0 0.0
    %703 = vmatprep.subr.mxu0 0.0
    %704 = vmatpush1.msra.mxu0 0.0
    %705 = vmatprep.subr.mxu0 0.0
    %706 = vmatpush1.msra.mxu0 0.0
    %707 = vmatprep.subr.mxu0 0.0
    %708 = vmatpush1.msra.mxu0 0.0
    %709 = vmatprep.subr.mxu0 0.0
    %710 = vmatpush1.msra.mxu0 0.0
    %711 = vmatprep.subr.mxu0 0.0
    %712 = vmatpush1.msra.mxu0 0.0
    %713 = vmatprep.subr.mxu0 0.0
    %714 = vmatpush1.msra.mxu0 0.0
    %715 = vmatprep.subr.mxu0 0.0
    %716 = vmatpush1.msra.mxu0 0.0
    %717 = vmatprep.subr.mxu0 0.0
    %718 = vmatpush1.msra.mxu0 0.0
    %719 = vmatprep.subr.mxu0 0.0
    %720 = vmatpush1.msra.mxu0 0.0
    %721 = vmatprep.subr.mxu0 0.0
    %722 = vmatpush1.msra.mxu0 0.0
    %723 = vmatprep.subr.mxu0 0.0
    %724 = vmatpush1.msra.mxu0 0.0
    %725 = vmatprep.subr.mxu0 0.0
    %726 = vmatpush1.msra.mxu0 0.0
    %727 = vmatprep.subr.mxu0 0.0
    %728 = vmatpush1.msra.mxu0 0.0
    %729 = vmatprep.subr.mxu0 0.0
    %730 = vmatpush1.msra.mxu0 0.0
    %731 = vmatprep.subr.mxu0 0.0
    %732 = vmatpush1.msra.mxu0 %v696
    %733 = vmatprep.subr.mxu0 0.0
    %734 = vmatpush2.msra.mxu0 0.0
    %735 = vmatprep.subr.mxu0 0.0
    %736 = vmatpush2.msra.mxu0 0.0
    %737 = vmatprep.subr.mxu0 0.0
    %738 = vmatpush2.msra.mxu0 0.0
    %739 = vmatprep.subr.mxu0 0.0
    %740 = vmatpush2.msra.mxu0 0.0
    %741 = vmatprep.subr.mxu0 0.0
    %742 = vmatpush2.msra.mxu0 0.0
    %743 = vmatprep.subr.mxu0 0.0
    %744 = vmatpush2.msra.mxu0 0.0
    %745 = vmatprep.subr.mxu0 0.0
    %746 = vmatpush2.msra.mxu0 0.0
    %747 = vmatprep.subr.mxu0 0.0
    %748 = vmatpush2.msra.mxu0 0.0
    %749 = vmatprep.subr.mxu0 0.0
    %750 = vmatpush2.msra.mxu0 0.0
    %751 = vmatprep.subr.mxu0 0.0
    %752 = vmatpush2.msra.mxu0 0.0
    %753 = vmatprep.subr.mxu0 0.0
    %754 = vmatpush2.msra.mxu0 0.0
    %755 = vmatprep.subr.mxu0 0.0
    %756 = vmatpush2.msra.mxu0 0.0
    %757 = vmatprep.subr.mxu0 0.0
    %758 = vmatpush2.msra.mxu0 0.0
    %759 = vmatprep.subr.mxu0 0.0
    %760 = vmatpush2.msra.mxu0 0.0
    %761 = vmatprep.subr.mxu0 0.0
    %762 = vmatpush2.msra.mxu0 0.0
    %763 = vmatprep.subr.mxu0 0.0
    %764 = vmatpush2.msra.mxu0 0.0
    %765 = vmatprep.mubr.f32.mxu0 0.0
    %766 = vmatmul.mubr.f32.gmra.mxu0 %v699
    %v767 = vpop.f32.mrf.mxu0
    %v768 = vadd.f32 0.0, %v767
    %v769 = vpop.f32.mrf.mxu0
    %770 = vdwg.mxu0
    %773 = vrot.lane.b32.xlu0 %v692, 16
    %v774 = vpop.permute.xlu0 %773
    %775 = vrot.lane.b32.xlu0 %v768, 16
    %v776 = vpop.permute.xlu0 %775
    %v779 = vsel %vm108, %v360, %v774
    %v780 = vsel %vm108, %v436, %v776
    %v781 = vld [vmem:[#allocation2 + $0x30] sm:$0xf]
    %v782 = vld [vmem:[#allocation2 + $0x34] sm:$0xf]
    %v783 = vld [vmem:[#allocation2 + $0x38] sm:$0xf]
    %v784 = vld [vmem:[#allocation2 + $0x3c] sm:$0xf]
    %v785 = vpack.c.bf16 %v780, %v779
    %v786 = vlaneseq
    %v787 = vshrl.u32 %v786, 7
    %v788 = vsub.s32 1, %v787
    %v789 = vrot.slane %v41, %v788
    %v794 = vunpack.c.l.b16 %v781
    %v795 = vunpack.c.l.b16 %v782
    %v796 = vunpack.c.l.b16 %v783
    %v797 = vunpack.c.l.b16 %v784
    %v798 = vpack.c.b16 %v795, %v794
    %v799 = vpack.c.b16 %v797, %v796
    %v803 = vsel %vm60, %v785, 0
    %805 = vmatprep.subr.bf16.mxu0 0
    %806 = vmatpush1.bf16.msra.mxu0 0
    %807 = vmatprep.subr.bf16.mxu0 0
    %808 = vmatpush1.bf16.msra.mxu0 0
    %809 = vmatprep.subr.bf16.mxu0 0
    %810 = vmatpush1.bf16.msra.mxu0 0
    %811 = vmatprep.subr.bf16.mxu0 0
    %812 = vmatpush1.bf16.msra.mxu0 0
    %813 = vmatprep.subr.bf16.mxu0 0
    %814 = vmatpush1.bf16.msra.mxu0 0
    %815 = vmatprep.subr.bf16.mxu0 0
    %816 = vmatpush1.bf16.msra.mxu0 0
    %817 = vmatprep.subr.bf16.mxu0 0
    %818 = vmatpush1.bf16.msra.mxu0 %v799
    %819 = vmatprep.subr.bf16.mxu0 0
    %820 = vmatpush1.bf16.msra.mxu0 %v798
    %821 = vmatprep.subr.bf16.mxu0 0
    %822 = vmatpush2.bf16.msra.mxu0 0
    %823 = vmatprep.subr.bf16.mxu0 0
    %824 = vmatpush2.bf16.msra.mxu0 0
    %825 = vmatprep.subr.bf16.mxu0 0
    %826 = vmatpush2.bf16.msra.mxu0 0
    %827 = vmatprep.subr.bf16.mxu0 0
    %828 = vmatpush2.bf16.msra.mxu0 0
    %829 = vmatprep.subr.bf16.mxu0 0
    %830 = vmatpush2.bf16.msra.mxu0 0
    %831 = vmatprep.subr.bf16.mxu0 0
    %832 = vmatpush2.bf16.msra.mxu0 0
    %833 = vmatprep.subr.bf16.mxu0 0
    %834 = vmatpush2.bf16.msra.mxu0 0
    %835 = vmatprep.subr.bf16.mxu0 0
    %836 = vmatpush2.bf16.msra.mxu0 0
    %837 = vmatprep.mubr.bf16.mxu0 0
    %838 = vmatmul.mubr.bf16.gmra.mxu0 %v803
    %v839 = vpop.f32.mrf.mxu0
    %v840 = vadd.f32 %v789, %v839
    %v841 = vpop.f32.mrf.mxu0
    %v842 = vpop.f32.mrf.mxu0
    %v843 = vadd.f32 %v789, %v842
    %v844 = vpop.f32.mrf.mxu0
    %845 = vdwg.mxu0
    %v846 = vadd.f32 %v840, %v33
    %v847 = vadd.f32 %v843, %v35
    %v848 = vsel %vm60, %v846, 0.0
    %849 = vadd.xlane.f32.xlu0 %v848
    %v850 = vpop.xlane.xlu0 %849
    %v851 = vsel %vm60, %v847, 0.0
    %852 = vadd.xlane.f32.xlu0 %v851
    %v853 = vpop.xlane.xlu0 %852
    %v854 = vrcp.pop 32.0
    %v855 = vmul.f32 %v850, %v854
    %v856 = vmul.f32 %v853, %v854
    %v857 = vsub.f32 %v846, %v855
    %v858 = vsub.f32 %v847, %v856
    %v859 = vmul.f32 %v857, %v857
    %v860 = vmul.f32 %v858, %v858
    %v861 = vsel %vm60, %v859, 0.0
    %862 = vadd.xlane.f32.xlu0 %v861
    %v863 = vpop.xlane.xlu0 %862
    %v864 = vsel %vm60, %v860, 0.0
    %865 = vadd.xlane.f32.xlu0 %v864
    %v866 = vpop.xlane.xlu0 %865
    %v867 = vmul.f32 %v863, %v854
    %v868 = vmul.f32 %v866, %v854
    %v869 = vadd.f32 %v867, 1e-05
    %v870 = vadd.f32 %v868, 1e-05
    %v871 = vrsqrt.pop %v869
    %v872 = vrsqrt.pop %v870
    %v873 = vmul.f32 %v857, %v871
    %v874 = vmul.f32 %v858, %v872
    %v875 = vlaneseq
    %v876 = vshrl.u32 %v875, 7
    %v877 = vsub.s32 2, %v876
    %v878 = vrot.slane %v41, %v877
    %v879 = vmul.f32 %v873, %v878
    %v880 = vmul.f32 %v874, %v878
    %v881 = vlaneseq
    %v882 = vshrl.u32 %v881, 7
    %v883 = vsub.s32 3, %v882
    %v884 = vrot.slane %v41, %v883
    %v885 = vadd.f32 %v879, %v884
    %v886 = vadd.f32 %v880, %v884
    %v887 = vld [vmem:[#allocation2 + $0x40] sm:$0xf]
    %v888 = vld [vmem:[#allocation2 + $0x44] sm:$0xf]
    %v889 = vld [vmem:[#allocation2 + $0x48] sm:$0xf]
    %v890 = vld [vmem:[#allocation2 + $0x4c] sm:$0xf]
    %v891 = vpack.c.bf16 %v886, %v885
    %v896 = vunpack.c.l.b16 %v887
    %v897 = vunpack.c.l.b16 %v888
    %v898 = vunpack.c.l.b16 %v889
    %v899 = vunpack.c.l.b16 %v890
    %v900 = vpack.c.b16 %v897, %v896
    %v901 = vpack.c.b16 %v899, %v898
    %v905 = vsel %vm60, %v891, 0
    %907 = vmatprep.subr.bf16.mxu0 0
    %908 = vmatpush1.bf16.msra.mxu0 0
    %909 = vmatprep.subr.bf16.mxu0 0
    %910 = vmatpush1.bf16.msra.mxu0 0
    %911 = vmatprep.subr.bf16.mxu0 0
    %912 = vmatpush1.bf16.msra.mxu0 0
    %913 = vmatprep.subr.bf16.mxu0 0
    %914 = vmatpush1.bf16.msra.mxu0 0
    %915 = vmatprep.subr.bf16.mxu0 0
    %916 = vmatpush1.bf16.msra.mxu0 0
    %917 = vmatprep.subr.bf16.mxu0 0
    %918 = vmatpush1.bf16.msra.mxu0 0
    %919 = vmatprep.subr.bf16.mxu0 0
    %920 = vmatpush1.bf16.msra.mxu0 %v901
    %921 = vmatprep.subr.bf16.mxu0 0
    %922 = vmatpush1.bf16.msra.mxu0 %v900
    %923 = vmatprep.subr.bf16.mxu0 0
    %924 = vmatpush2.bf16.msra.mxu0 0
    %925 = vmatprep.subr.bf16.mxu0 0
    %926 = vmatpush2.bf16.msra.mxu0 0
    %927 = vmatprep.subr.bf16.mxu0 0
    %928 = vmatpush2.bf16.msra.mxu0 0
    %929 = vmatprep.subr.bf16.mxu0 0
    %930 = vmatpush2.bf16.msra.mxu0 0
    %931 = vmatprep.subr.bf16.mxu0 0
    %932 = vmatpush2.bf16.msra.mxu0 0
    %933 = vmatprep.subr.bf16.mxu0 0
    %934 = vmatpush2.bf16.msra.mxu0 0
    %935 = vmatprep.subr.bf16.mxu0 0
    %936 = vmatpush2.bf16.msra.mxu0 0
    %937 = vmatprep.subr.bf16.mxu0 0
    %938 = vmatpush2.bf16.msra.mxu0 0
    %939 = vmatprep.mubr.bf16.mxu0 0
    %940 = vmatmul.mubr.bf16.gmra.mxu0 %v905
    %v941 = vpop.f32.mrf.mxu0
    %v942 = vadd.f32 0.0, %v941
    %v943 = vpop.f32.mrf.mxu0
    %v944 = vpop.f32.mrf.mxu0
    %v945 = vadd.f32 0.0, %v944
    %v946 = vpop.f32.mrf.mxu0
    %947 = vdwg.mxu0
    %v948 = vld [vmem:[#allocation2 + $0x10] sm:$0xf]
    %v949 = vld [vmem:[#allocation2 + $0x14] sm:$0xf]
    %v950 = vld [vmem:[#allocation2 + $0x18] sm:$0xf]
    %v951 = vld [vmem:[#allocation2 + $0x1c] sm:$0xf]
    %v952 = vld [vmem:[#allocation2 + $0x20] sm:$0xf]
    %v953 = vld [vmem:[#allocation2 + $0x24] sm:$0xf]
    %v954 = vld [vmem:[#allocation2 + $0x28] sm:$0xf]
    %v955 = vld [vmem:[#allocation2 + $0x2c] sm:$0xf]
    %v956 = vpack.c.bf16 %v36, %v34
    %v965 = vunpack.c.l.b16 %v948
    %v966 = vunpack.c.l.b16 %v949
    %v967 = vunpack.c.l.b16 %v950
    %v968 = vunpack.c.l.b16 %v951
    %v969 = vunpack.c.l.b16 %v952
    %v970 = vunpack.c.l.b16 %v953
    %v971 = vunpack.c.l.b16 %v954
    %v972 = vunpack.c.l.b16 %v955
    %v973 = vpack.c.b16 %v966, %v965
    %v974 = vpack.c.b16 %v968, %v967
    %v975 = vpack.c.b16 %v970, %v969
    %v976 = vpack.c.b16 %v972, %v971
    %vm981 = vcmask 523264
    %v983 = vsel %vm981, %v956, 0
    %985 = vmatprep.subr.bf16.mxu0 0
    %986 = vmatpush1.bf16.msra.mxu0 0
    %987 = vmatprep.subr.bf16.mxu0 0
    %988 = vmatpush1.bf16.msra.mxu0 0
    %989 = vmatprep.subr.bf16.mxu0 0
    %990 = vmatpush1.bf16.msra.mxu0 0
    %991 = vmatprep.subr.bf16.mxu0 0
    %992 = vmatpush1.bf16.msra.mxu0 0
    %993 = vmatprep.subr.bf16.mxu0 0
    %994 = vmatpush1.bf16.msra.mxu0 %v976
    %995 = vmatprep.subr.bf16.mxu0 0
    %996 = vmatpush1.bf16.msra.mxu0 %v975
    %997 = vmatprep.subr.bf16.mxu0 0
    %998 = vmatpush1.bf16.msra.mxu0 %v974
    %999 = vmatprep.subr.bf16.mxu0 0
    %1000 = vmatpush1.bf16.msra.mxu0 %v973
    %1001 = vmatprep.subr.bf16.mxu0 0
    %1002 = vmatpush2.bf16.msra.mxu0 0
    %1003 = vmatprep.subr.bf16.mxu0 0
    %1004 = vmatpush2.bf16.msra.mxu0 0
    %1005 = vmatprep.subr.bf16.mxu0 0
    %1006 = vmatpush2.bf16.msra.mxu0 0
    %1007 = vmatprep.subr.bf16.mxu0 0
    %1008 = vmatpush2.bf16.msra.mxu0 0
    %1009 = vmatprep.subr.bf16.mxu0 0
    %1010 = vmatpush2.bf16.msra.mxu0 0
    %1011 = vmatprep.subr.bf16.mxu0 0
    %1012 = vmatpush2.bf16.msra.mxu0 0
    %1013 = vmatprep.subr.bf16.mxu0 0
    %1014 = vmatpush2.bf16.msra.mxu0 0
    %1015 = vmatprep.subr.bf16.mxu0 0
    %1016 = vmatpush2.bf16.msra.mxu0 0
    %1017 = vmatprep.mubr.bf16.mxu0 0
    %1018 = vmatmul.mubr.bf16.gmra.mxu0 %v983
    %v1019 = vpop.f32.mrf.mxu0
    %v1020 = vadd.f32 0.0, %v1019
    %v1021 = vpop.f32.mrf.mxu0
    %v1022 = vpop.f32.mrf.mxu0
    %v1023 = vadd.f32 0.0, %v1022
    %v1024 = vpop.f32.mrf.mxu0
    %1025 = vdwg.mxu0
    %v1027 = vsel %vm108, %v942, 0
    %v1030 = vsel %vm108, %v1020, 0
    %1032 = vmatprep.subr.mxu0 0.0
    %1033 = vmatpush1.xpose.msra.mxu0 0.0
    %1034 = vmatprep.subr.mxu0 0.0
    %1035 = vmatpush1.xpose.msra.mxu0 0.0
    %1036 = vmatprep.subr.mxu0 0.0
    %1037 = vmatpush1.xpose.msra.mxu0 0.0
    %1038 = vmatprep.subr.mxu0 0.0
    %1039 = vmatpush1.xpose.msra.mxu0 0.0
    %1040 = vmatprep.subr.mxu0 0.0
    %1041 = vmatpush1.xpose.msra.mxu0 0.0
    %1042 = vmatprep.subr.mxu0 0.0
    %1043 = vmatpush1.xpose.msra.mxu0 0.0
    %1044 = vmatprep.subr.mxu0 0.0
    %1045 = vmatpush1.xpose.msra.mxu0 0.0
    %1046 = vmatprep.subr.mxu0 0.0
    %1047 = vmatpush1.xpose.msra.mxu0 0.0
    %1048 = vmatprep.subr.mxu0 0.0
    %1049 = vmatpush1.xpose.msra.mxu0 0.0
    %1050 = vmatprep.subr.mxu0 0.0
    %1051 = vmatpush1.xpose.msra.mxu0 0.0
    %1052 = vmatprep.subr.mxu0 0.0
    %1053 = vmatpush1.xpose.msra.mxu0 0.0
    %1054 = vmatprep.subr.mxu0 0.0
    %1055 = vmatpush1.xpose.msra.mxu0 0.0
    %1056 = vmatprep.subr.mxu0 0.0
    %1057 = vmatpush1.xpose.msra.mxu0 0.0
    %1058 = vmatprep.subr.mxu0 0.0
    %1059 = vmatpush1.xpose.msra.mxu0 0.0
    %1060 = vmatprep.subr.mxu0 0.0
    %1061 = vmatpush1.xpose.msra.mxu0 0.0
    %1062 = vmatprep.subr.mxu0 0.0
    %1063 = vmatpush1.xpose.msra.mxu0 %v1030
    %1064 = vmatprep.subr.mxu0 0.0
    %1065 = vmatpush2.xpose.msra.mxu0 0.0
    %1066 = vmatprep.subr.mxu0 0.0
    %1067 = vmatpush2.xpose.msra.mxu0 0.0
    %1068 = vmatprep.subr.mxu0 0.0
    %1069 = vmatpush2.xpose.msra.mxu0 0.0
    %1070 = vmatprep.subr.mxu0 0.0
    %1071 = vmatpush2.xpose.msra.mxu0 0.0
    %1072 = vmatprep.subr.mxu0 0.0
    %1073 = vmatpush2.xpose.msra.mxu0 0.0
    %1074 = vmatprep.subr.mxu0 0.0
    %1075 = vmatpush2.xpose.msra.mxu0 0.0
    %1076 = vmatprep.subr.mxu0 0.0
    %1077 = vmatpush2.xpose.msra.mxu0 0.0
    %1078 = vmatprep.subr.mxu0 0.0
    %1079 = vmatpush2.xpose.msra.mxu0 0.0
    %1080 = vmatprep.subr.mxu0 0.0
    %1081 = vmatpush2.xpose.msra.mxu0 0.0
    %1082 = vmatprep.subr.mxu0 0.0
    %1083 = vmatpush2.xpose.msra.mxu0 0.0
    %1084 = vmatprep.subr.mxu0 0.0
    %1085 = vmatpush2.xpose.msra.mxu0 0.0
    %1086 = vmatprep.subr.mxu0 0.0
    %1087 = vmatpush2.xpose.msra.mxu0 0.0
    %1088 = vmatprep.subr.mxu0 0.0
    %1089 = vmatpush2.xpose.msra.mxu0 0.0
    %1090 = vmatprep.subr.mxu0 0.0
    %1091 = vmatpush2.xpose.msra.mxu0 0.0
    %1092 = vmatprep.subr.mxu0 0.0
    %1093 = vmatpush2.xpose.msra.mxu0 0.0
    %1094 = vmatprep.subr.mxu0 0.0
    %1095 = vmatpush2.xpose.msra.mxu0 0.0
    %1096 = vmatprep.mubr.f32.mxu0 0.0
    %1097 = vmatmul.mubr.f32.gmra.mxu0 %v1027
    %v1098 = vpop.f32.mrf.mxu0
    %v1099 = vadd.f32 0.0, %v1098
    %v1100 = vpop.f32.mrf.mxu0
    %1101 = vdwg.mxu0
    %v1103 = vsel %vm108, %v945, 0
    %v1106 = vsel %vm108, %v1023, 0
    %1108 = vmatprep.subr.mxu0 0.0
    %1109 = vmatpush1.xpose.msra.mxu0 0.0
    %1110 = vmatprep.subr.mxu0 0.0
    %1111 = vmatpush1.xpose.msra.mxu0 0.0
    %1112 = vmatprep.subr.mxu0 0.0
    %1113 = vmatpush1.xpose.msra.mxu0 0.0
    %1114 = vmatprep.subr.mxu0 0.0
    %1115 = vmatpush1.xpose.msra.mxu0 0.0
    %1116 = vmatprep.subr.mxu0 0.0
    %1117 = vmatpush1.xpose.msra.mxu0 0.0
    %1118 = vmatprep.subr.mxu0 0.0
    %1119 = vmatpush1.xpose.msra.mxu0 0.0
    %1120 = vmatprep.subr.mxu0 0.0
    %1121 = vmatpush1.xpose.msra.mxu0 0.0
    %1122 = vmatprep.subr.mxu0 0.0
    %1123 = vmatpush1.xpose.msra.mxu0 0.0
    %1124 = vmatprep.subr.mxu0 0.0
    %1125 = vmatpush1.xpose.msra.mxu0 0.0
    %1126 = vmatprep.subr.mxu0 0.0
    %1127 = vmatpush1.xpose.msra.mxu0 0.0
    %1128 = vmatprep.subr.mxu0 0.0
    %1129 = vmatpush1.xpose.msra.mxu0 0.0
    %1130 = vmatprep.subr.mxu0 0.0
    %1131 = vmatpush1.xpose.msra.mxu0 0.0
    %1132 = vmatprep.subr.mxu0 0.0
    %1133 = vmatpush1.xpose.msra.mxu0 0.0
    %1134 = vmatprep.subr.mxu0 0.0
    %1135 = vmatpush1.xpose.msra.mxu0 0.0
    %1136 = vmatprep.subr.mxu0 0.0
    %1137 = vmatpush1.xpose.msra.mxu0 0.0
    %1138 = vmatprep.subr.mxu0 0.0
    %1139 = vmatpush1.xpose.msra.mxu0 %v1106
    %1140 = vmatprep.subr.mxu0 0.0
    %1141 = vmatpush2.xpose.msra.mxu0 0.0
    %1142 = vmatprep.subr.mxu0 0.0
    %1143 = vmatpush2.xpose.msra.mxu0 0.0
    %1144 = vmatprep.subr.mxu0 0.0
    %1145 = vmatpush2.xpose.msra.mxu0 0.0
    %1146 = vmatprep.subr.mxu0 0.0
    %1147 = vmatpush2.xpose.msra.mxu0 0.0
    %1148 = vmatprep.subr.mxu0 0.0
    %1149 = vmatpush2.xpose.msra.mxu0 0.0
    %1150 = vmatprep.subr.mxu0 0.0
    %1151 = vmatpush2.xpose.msra.mxu0 0.0
    %1152 = vmatprep.subr.mxu0 0.0
    %1153 = vmatpush2.xpose.msra.mxu0 0.0
    %1154 = vmatprep.subr.mxu0 0.0
    %1155 = vmatpush2.xpose.msra.mxu0 0.0
    %1156 = vmatprep.subr.mxu0 0.0
    %1157 = vmatpush2.xpose.msra.mxu0 0.0
    %1158 = vmatprep.subr.mxu0 0.0
    %1159 = vmatpush2.xpose.msra.mxu0 0.0
    %1160 = vmatprep.subr.mxu0 0.0
    %1161 = vmatpush2.xpose.msra.mxu0 0.0
    %1162 = vmatprep.subr.mxu0 0.0
    %1163 = vmatpush2.xpose.msra.mxu0 0.0
    %1164 = vmatprep.subr.mxu0 0.0
    %1165 = vmatpush2.xpose.msra.mxu0 0.0
    %1166 = vmatprep.subr.mxu0 0.0
    %1167 = vmatpush2.xpose.msra.mxu0 0.0
    %1168 = vmatprep.subr.mxu0 0.0
    %1169 = vmatpush2.xpose.msra.mxu0 0.0
    %1170 = vmatprep.subr.mxu0 0.0
    %1171 = vmatpush2.xpose.msra.mxu0 0.0
    %1172 = vmatprep.mubr.f32.mxu0 0.0
    %1173 = vmatmul.mubr.f32.gmra.mxu0 %v1103
    %v1174 = vpop.f32.mrf.mxu0
    %v1175 = vadd.f32 0.0, %v1174
    %v1176 = vpop.f32.mrf.mxu0
    %1177 = vdwg.mxu0
    %vm1178 = vcmp.eq.f32.partialorder %v38, 0.0
    %vm1179 = vcmp.eq.f32.partialorder %v40, 0.0
    %v1180 = vsel %vm1178, 1, 0
    %v1181 = vsel %vm1179, 1, 0
    %v1182 = vlaneseq
    %v1183 = vshrl.u32 %v1182, 7
    %v1184 = vsub.s32 0, %v1183
    %v1185 = vrot.slane %v1180, %v1184
    %v1186 = vlaneseq
    %v1187 = vshrl.u32 %v1186, 7
    %v1188 = vsub.s32 0, %v1187
    %v1189 = vrot.slane %v1181, %v1188
    %vm1190 = vcmp.eq.s32.totalorder %v1185, 1
    %vm1191 = vcmp.eq.s32.totalorder %v1189, 1
    %v1192 = vsel %vm1190, -1e+20, %v1099
    %v1193 = vsel %vm1191, -1e+20, %v1175
    %v1194 = vsel %vm264, %v1192, -inf
    %1195 = vmax.xlane.f32.xlu0 %v1194
    %v1196 = vpop.xlane.xlu0 %1195
    %v1197 = vsel %vm264, %v1193, -inf
    %1198 = vmax.xlane.f32.xlu0 %v1197
    %v1199 = vpop.xlane.xlu0 %1198
    %v1200 = vsub.f32 %v1192, %v1196
    %v1201 = vsub.f32 %v1193, %v1199
    %v1202 = vmul.f32 %v1200, 1.442695
    %v1203 = vpow.pop %v1202
    %v1204 = vmul.f32 %v1201, 1.442695
    %v1205 = vpow.pop %v1204
    %v1206 = vsel %vm264, %v1203, 0.0
    %1207 = vadd.xlane.f32.xlu0 %v1206
    %v1208 = vpop.xlane.xlu0 %1207
    %v1209 = vsel %vm264, %v1205, 0.0
    %1210 = vadd.xlane.f32.xlu0 %v1209
    %v1211 = vpop.xlane.xlu0 %1210
    %v1212 = vrcp.pop %v1208
    %v1213 = vrcp.pop %v1211
    %v1214 = vmul.f32 %v1203, %v1212
    %v1215 = vmul.f32 %v1205, %v1213
    %1216 = vrot.lane.b32.xlu0 %v1020, 96
    %v1217 = vpop.permute.xlu0 %1216
    %v1220 = vsel %vm264, %v1214, 0
    %1222 = vmatprep.subr.mxu0 0.0
    %1223 = vmatpush1.msra.mxu0 0.0
    %1224 = vmatprep.subr.mxu0 0.0
    %1225 = vmatpush1.msra.mxu0 0.0
    %1226 = vmatprep.subr.mxu0 0.0
    %1227 = vmatpush1.msra.mxu0 0.0
    %1228 = vmatprep.subr.mxu0 0.0
    %1229 = vmatpush1.msra.mxu0 0.0
    %1230 = vmatprep.subr.mxu0 0.0
    %1231 = vmatpush1.msra.mxu0 0.0
    %1232 = vmatprep.subr.mxu0 0.0
    %1233 = vmatpush1.msra.mxu0 0.0
    %1234 = vmatprep.subr.mxu0 0.0
    %1235 = vmatpush1.msra.mxu0 0.0
    %1236 = vmatprep.subr.mxu0 0.0
    %1237 = vmatpush1.msra.mxu0 0.0
    %1238 = vmatprep.subr.mxu0 0.0
    %1239 = vmatpush1.msra.mxu0 0.0
    %1240 = vmatprep.subr.mxu0 0.0
    %1241 = vmatpush1.msra.mxu0 0.0
    %1242 = vmatprep.subr.mxu0 0.0
    %1243 = vmatpush1.msra.mxu0 0.0
    %1244 = vmatprep.subr.mxu0 0.0
    %1245 = vmatpush1.msra.mxu0 0.0
    %1246 = vmatprep.subr.mxu0 0.0
    %1247 = vmatpush1.msra.mxu0 0.0
    %1248 = vmatprep.subr.mxu0 0.0
    %1249 = vmatpush1.msra.mxu0 0.0
    %1250 = vmatprep.subr.mxu0 0.0
    %1251 = vmatpush1.msra.mxu0 0.0
    %1252 = vmatprep.subr.mxu0 0.0
    %1253 = vmatpush1.msra.mxu0 %v1217
    %1254 = vmatprep.subr.mxu0 0.0
    %1255 = vmatpush2.msra.mxu0 0.0
    %1256 = vmatprep.subr.mxu0 0.0
    %1257 = vmatpush2.msra.mxu0 0.0
    %1258 = vmatprep.subr.mxu0 0.0
    %1259 = vmatpush2.msra.mxu0 0.0
    %1260 = vmatprep.subr.mxu0 0.0
    %1261 = vmatpush2.msra.mxu0 0.0
    %1262 = vmatprep.subr.mxu0 0.0
    %1263 = vmatpush2.msra.mxu0 0.0
    %1264 = vmatprep.subr.mxu0 0.0
    %1265 = vmatpush2.msra.mxu0 0.0
    %1266 = vmatprep.subr.mxu0 0.0
    %1267 = vmatpush2.msra.mxu0 0.0
    %1268 = vmatprep.subr.mxu0 0.0
    %1269 = vmatpush2.msra.mxu0 0.0
    %1270 = vmatprep.subr.mxu0 0.0
    %1271 = vmatpush2.msra.mxu0 0.0
    %1272 = vmatprep.subr.mxu0 0.0
    %1273 = vmatpush2.msra.mxu0 0.0
    %1274 = vmatprep.subr.mxu0 0.0
    %1275 = vmatpush2.msra.mxu0 0.0
    %1276 = vmatprep.subr.mxu0 0.0
    %1277 = vmatpush2.msra.mxu0 0.0
    %1278 = vmatprep.subr.mxu0 0.0
    %1279 = vmatpush2.msra.mxu0 0.0
    %1280 = vmatprep.subr.mxu0 0.0
    %1281 = vmatpush2.msra.mxu0 0.0
    %1282 = vmatprep.subr.mxu0 0.0
    %1283 = vmatpush2.msra.mxu0 0.0
    %1284 = vmatprep.subr.mxu0 0.0
    %1285 = vmatpush2.msra.mxu0 0.0
    %1286 = vmatprep.mubr.f32.mxu0 0.0
    %1287 = vmatmul.mubr.f32.gmra.mxu0 %v1220
    %v1288 = vpop.f32.mrf.mxu0
    %v1289 = vadd.f32 0.0, %v1288
    %v1290 = vpop.f32.mrf.mxu0
    %1291 = vdwg.mxu0
    %1292 = vrot.lane.b32.xlu0 %v1023, 96
    %v1293 = vpop.permute.xlu0 %1292
    %v1296 = vsel %vm264, %v1215, 0
    %1298 = vmatprep.subr.mxu0 0.0
    %1299 = vmatpush1.msra.mxu0 0.0
    %1300 = vmatprep.subr.mxu0 0.0
    %1301 = vmatpush1.msra.mxu0 0.0
    %1302 = vmatprep.subr.mxu0 0.0
    %1303 = vmatpush1.msra.mxu0 0.0
    %1304 = vmatprep.subr.mxu0 0.0
    %1305 = vmatpush1.msra.mxu0 0.0
    %1306 = vmatprep.subr.mxu0 0.0
    %1307 = vmatpush1.msra.mxu0 0.0
    %1308 = vmatprep.subr.mxu0 0.0
    %1309 = vmatpush1.msra.mxu0 0.0
    %1310 = vmatprep.subr.mxu0 0.0
    %1311 = vmatpush1.msra.mxu0 0.0
    %1312 = vmatprep.subr.mxu0 0.0
    %1313 = vmatpush1.msra.mxu0 0.0
    %1314 = vmatprep.subr.mxu0 0.0
    %1315 = vmatpush1.msra.mxu0 0.0
    %1316 = vmatprep.subr.mxu0 0.0
    %1317 = vmatpush1.msra.mxu0 0.0
    %1318 = vmatprep.subr.mxu0 0.0
    %1319 = vmatpush1.msra.mxu0 0.0
    %1320 = vmatprep.subr.mxu0 0.0
    %1321 = vmatpush1.msra.mxu0 0.0
    %1322 = vmatprep.subr.mxu0 0.0
    %1323 = vmatpush1.msra.mxu0 0.0
    %1324 = vmatprep.subr.mxu0 0.0
    %1325 = vmatpush1.msra.mxu0 0.0
    %1326 = vmatprep.subr.mxu0 0.0
    %1327 = vmatpush1.msra.mxu0 0.0
    %1328 = vmatprep.subr.mxu0 0.0
    %1329 = vmatpush1.msra.mxu0 %v1293
    %1330 = vmatprep.subr.mxu0 0.0
    %1331 = vmatpush2.msra.mxu0 0.0
    %1332 = vmatprep.subr.mxu0 0.0
    %1333 = vmatpush2.msra.mxu0 0.0
    %1334 = vmatprep.subr.mxu0 0.0
    %1335 = vmatpush2.msra.mxu0 0.0
    %1336 = vmatprep.subr.mxu0 0.0
    %1337 = vmatpush2.msra.mxu0 0.0
    %1338 = vmatprep.subr.mxu0 0.0
    %1339 = vmatpush2.msra.mxu0 0.0
    %1340 = vmatprep.subr.mxu0 0.0
    %1341 = vmatpush2.msra.mxu0 0.0
    %1342 = vmatprep.subr.mxu0 0.0
    %1343 = vmatpush2.msra.mxu0 0.0
    %1344 = vmatprep.subr.mxu0 0.0
    %1345 = vmatpush2.msra.mxu0 0.0
    %1346 = vmatprep.subr.mxu0 0.0
    %1347 = vmatpush2.msra.mxu0 0.0
    %1348 = vmatprep.subr.mxu0 0.0
    %1349 = vmatpush2.msra.mxu0 0.0
    %1350 = vmatprep.subr.mxu0 0.0
    %1351 = vmatpush2.msra.mxu0 0.0
    %1352 = vmatprep.subr.mxu0 0.0
    %1353 = vmatpush2.msra.mxu0 0.0
    %1354 = vmatprep.subr.mxu0 0.0
    %1355 = vmatpush2.msra.mxu0 0.0
    %1356 = vmatprep.subr.mxu0 0.0
    %1357 = vmatpush2.msra.mxu0 0.0
    %1358 = vmatprep.subr.mxu0 0.0
    %1359 = vmatpush2.msra.mxu0 0.0
    %1360 = vmatprep.subr.mxu0 0.0
    %1361 = vmatpush2.msra.mxu0 0.0
    %1362 = vmatprep.mubr.f32.mxu0 0.0
    %1363 = vmatmul.mubr.f32.gmra.mxu0 %v1296
    %v1364 = vpop.f32.mrf.mxu0
    %v1365 = vadd.f32 0.0, %v1364
    %v1366 = vpop.f32.mrf.mxu0
    %1367 = vdwg.mxu0
    %1368 = vrot.lane.b32.xlu0 %v942, 112
    %v1369 = vpop.permute.xlu0 %1368
    %1370 = vrot.lane.b32.xlu0 %v1020, 112
    %v1371 = vpop.permute.xlu0 %1370
    %v1372 = vsel %vm108, %v1369, 0
    %v1374 = vsel %vm108, %v1371, 0
    %1376 = vmatprep.subr.mxu0 0.0
    %1377 = vmatpush1.xpose.msra.mxu0 0.0
    %1378 = vmatprep.subr.mxu0 0.0
    %1379 = vmatpush1.xpose.msra.mxu0 0.0
    %1380 = vmatprep.subr.mxu0 0.0
    %1381 = vmatpush1.xpose.msra.mxu0 0.0
    %1382 = vmatprep.subr.mxu0 0.0
    %1383 = vmatpush1.xpose.msra.mxu0 0.0
    %1384 = vmatprep.subr.mxu0 0.0
    %1385 = vmatpush1.xpose.msra.mxu0 0.0
    %1386 = vmatprep.subr.mxu0 0.0
    %1387 = vmatpush1.xpose.msra.mxu0 0.0
    %1388 = vmatprep.subr.mxu0 0.0
    %1389 = vmatpush1.xpose.msra.mxu0 0.0
    %1390 = vmatprep.subr.mxu0 0.0
    %1391 = vmatpush1.xpose.msra.mxu0 0.0
    %1392 = vmatprep.subr.mxu0 0.0
    %1393 = vmatpush1.xpose.msra.mxu0 0.0
    %1394 = vmatprep.subr.mxu0 0.0
    %1395 = vmatpush1.xpose.msra.mxu0 0.0
    %1396 = vmatprep.subr.mxu0 0.0
    %1397 = vmatpush1.xpose.msra.mxu0 0.0
    %1398 = vmatprep.subr.mxu0 0.0
    %1399 = vmatpush1.xpose.msra.mxu0 0.0
    %1400 = vmatprep.subr.mxu0 0.0
    %1401 = vmatpush1.xpose.msra.mxu0 0.0
    %1402 = vmatprep.subr.mxu0 0.0
    %1403 = vmatpush1.xpose.msra.mxu0 0.0
    %1404 = vmatprep.subr.mxu0 0.0
    %1405 = vmatpush1.xpose.msra.mxu0 0.0
    %1406 = vmatprep.subr.mxu0 0.0
    %1407 = vmatpush1.xpose.msra.mxu0 %v1374
    %1408 = vmatprep.subr.mxu0 0.0
    %1409 = vmatpush2.xpose.msra.mxu0 0.0
    %1410 = vmatprep.subr.mxu0 0.0
    %1411 = vmatpush2.xpose.msra.mxu0 0.0
    %1412 = vmatprep.subr.mxu0 0.0
    %1413 = vmatpush2.xpose.msra.mxu0 0.0
    %1414 = vmatprep.subr.mxu0 0.0
    %1415 = vmatpush2.xpose.msra.mxu0 0.0
    %1416 = vmatprep.subr.mxu0 0.0
    %1417 = vmatpush2.xpose.msra.mxu0 0.0
    %1418 = vmatprep.subr.mxu0 0.0
    %1419 = vmatpush2.xpose.msra.mxu0 0.0
    %1420 = vmatprep.subr.mxu0 0.0
    %1421 = vmatpush2.xpose.msra.mxu0 0.0
    %1422 = vmatprep.subr.mxu0 0.0
    %1423 = vmatpush2.xpose.msra.mxu0 0.0
    %1424 = vmatprep.subr.mxu0 0.0
    %1425 = vmatpush2.xpose.msra.mxu0 0.0
    %1426 = vmatprep.subr.mxu0 0.0
    %1427 = vmatpush2.xpose.msra.mxu0 0.0
    %1428 = vmatprep.subr.mxu0 0.0
    %1429 = vmatpush2.xpose.msra.mxu0 0.0
    %1430 = vmatprep.subr.mxu0 0.0
    %1431 = vmatpush2.xpose.msra.mxu0 0.0
    %1432 = vmatprep.subr.mxu0 0.0
    %1433 = vmatpush2.xpose.msra.mxu0 0.0
    %1434 = vmatprep.subr.mxu0 0.0
    %1435 = vmatpush2.xpose.msra.mxu0 0.0
    %1436 = vmatprep.subr.mxu0 0.0
    %1437 = vmatpush2.xpose.msra.mxu0 0.0
    %1438 = vmatprep.subr.mxu0 0.0
    %1439 = vmatpush2.xpose.msra.mxu0 0.0
    %1440 = vmatprep.mubr.f32.mxu0 0.0
    %1441 = vmatmul.mubr.f32.gmra.mxu0 %v1372
    %v1442 = vpop.f32.mrf.mxu0
    %v1443 = vadd.f32 0.0, %v1442
    %v1444 = vpop.f32.mrf.mxu0
    %1445 = vdwg.mxu0
    %1446 = vrot.lane.b32.xlu0 %v945, 112
    %v1447 = vpop.permute.xlu0 %1446
    %1448 = vrot.lane.b32.xlu0 %v1023, 112
    %v1449 = vpop.permute.xlu0 %1448
    %v1450 = vsel %vm108, %v1447, 0
    %v1452 = vsel %vm108, %v1449, 0
    %1454 = vmatprep.subr.mxu0 0.0
    %1455 = vmatpush1.xpose.msra.mxu0 0.0
    %1456 = vmatprep.subr.mxu0 0.0
    %1457 = vmatpush1.xpose.msra.mxu0 0.0
    %1458 = vmatprep.subr.mxu0 0.0
    %1459 = vmatpush1.xpose.msra.mxu0 0.0
    %1460 = vmatprep.subr.mxu0 0.0
    %1461 = vmatpush1.xpose.msra.mxu0 0.0
    %1462 = vmatprep.subr.mxu0 0.0
    %1463 = vmatpush1.xpose.msra.mxu0 0.0
    %1464 = vmatprep.subr.mxu0 0.0
    %1465 = vmatpush1.xpose.msra.mxu0 0.0
    %1466 = vmatprep.subr.mxu0 0.0
    %1467 = vmatpush1.xpose.msra.mxu0 0.0
    %1468 = vmatprep.subr.mxu0 0.0
    %1469 = vmatpush1.xpose.msra.mxu0 0.0
    %1470 = vmatprep.subr.mxu0 0.0
    %1471 = vmatpush1.xpose.msra.mxu0 0.0
    %1472 = vmatprep.subr.mxu0 0.0
    %1473 = vmatpush1.xpose.msra.mxu0 0.0
    %1474 = vmatprep.subr.mxu0 0.0
    %1475 = vmatpush1.xpose.msra.mxu0 0.0
    %1476 = vmatprep.subr.mxu0 0.0
    %1477 = vmatpush1.xpose.msra.mxu0 0.0
    %1478 = vmatprep.subr.mxu0 0.0
    %1479 = vmatpush1.xpose.msra.mxu0 0.0
    %1480 = vmatprep.subr.mxu0 0.0
    %1481 = vmatpush1.xpose.msra.mxu0 0.0
    %1482 = vmatprep.subr.mxu0 0.0
    %1483 = vmatpush1.xpose.msra.mxu0 0.0
    %1484 = vmatprep.subr.mxu0 0.0
    %1485 = vmatpush1.xpose.msra.mxu0 %v1452
    %1486 = vmatprep.subr.mxu0 0.0
    %1487 = vmatpush2.xpose.msra.mxu0 0.0
    %1488 = vmatprep.subr.mxu0 0.0
    %1489 = vmatpush2.xpose.msra.mxu0 0.0
    %1490 = vmatprep.subr.mxu0 0.0
    %1491 = vmatpush2.xpose.msra.mxu0 0.0
    %1492 = vmatprep.subr.mxu0 0.0
    %1493 = vmatpush2.xpose.msra.mxu0 0.0
    %1494 = vmatprep.subr.mxu0 0.0
    %1495 = vmatpush2.xpose.msra.mxu0 0.0
    %1496 = vmatprep.subr.mxu0 0.0
    %1497 = vmatpush2.xpose.msra.mxu0 0.0
    %1498 = vmatprep.subr.mxu0 0.0
    %1499 = vmatpush2.xpose.msra.mxu0 0.0
    %1500 = vmatprep.subr.mxu0 0.0
    %1501 = vmatpush2.xpose.msra.mxu0 0.0
    %1502 = vmatprep.subr.mxu0 0.0
    %1503 = vmatpush2.xpose.msra.mxu0 0.0
    %1504 = vmatprep.subr.mxu0 0.0
    %1505 = vmatpush2.xpose.msra.mxu0 0.0
    %1506 = vmatprep.subr.mxu0 0.0
    %1507 = vmatpush2.xpose.msra.mxu0 0.0
    %1508 = vmatprep.subr.mxu0 0.0
    %1509 = vmatpush2.xpose.msra.mxu0 0.0
    %1510 = vmatprep.subr.mxu0 0.0
    %1511 = vmatpush2.xpose.msra.mxu0 0.0
    %1512 = vmatprep.subr.mxu0 0.0
    %1513 = vmatpush2.xpose.msra.mxu0 0.0
    %1514 = vmatprep.subr.mxu0 0.0
    %1515 = vmatpush2.xpose.msra.mxu0 0.0
    %1516 = vmatprep.subr.mxu0 0.0
    %1517 = vmatpush2.xpose.msra.mxu0 0.0
    %1518 = vmatprep.mubr.f32.mxu0 0.0
    %1519 = vmatmul.mubr.f32.gmra.mxu0 %v1450
    %v1520 = vpop.f32.mrf.mxu0
    %v1521 = vadd.f32 0.0, %v1520
    %v1522 = vpop.f32.mrf.mxu0
    %1523 = vdwg.mxu0
    %v1524 = vsel %vm1190, -1e+20, %v1443
    %v1525 = vsel %vm1191, -1e+20, %v1521
    %v1526 = vsel %vm264, %v1524, -inf
    %1527 = vmax.xlane.f32.xlu0 %v1526
    %v1528 = vpop.xlane.xlu0 %1527
    %v1529 = vsel %vm264, %v1525, -inf
    %1530 = vmax.xlane.f32.xlu0 %v1529
    %v1531 = vpop.xlane.xlu0 %1530
    %v1532 = vsub.f32 %v1524, %v1528
    %v1533 = vsub.f32 %v1525, %v1531
    %v1534 = vmul.f32 %v1532, 1.442695
    %v1535 = vpow.pop %v1534
    %v1536 = vmul.f32 %v1533, 1.442695
    %v1537 = vpow.pop %v1536
    %v1538 = vsel %vm264, %v1535, 0.0
    %1539 = vadd.xlane.f32.xlu0 %v1538
    %v1540 = vpop.xlane.xlu0 %1539
    %v1541 = vsel %vm264, %v1537, 0.0
    %1542 = vadd.xlane.f32.xlu0 %v1541
    %v1543 = vpop.xlane.xlu0 %1542
    %v1544 = vrcp.pop %v1540
    %v1545 = vrcp.pop %v1543
    %v1546 = vmul.f32 %v1535, %v1544
    %v1547 = vmul.f32 %v1537, %v1545
    %1548 = vrot.lane.b32.xlu0 %v1020, 80
    %v1549 = vpop.permute.xlu0 %1548
    %v1552 = vsel %vm264, %v1546, 0
    %1554 = vmatprep.subr.mxu0 0.0
    %1555 = vmatpush1.msra.mxu0 0.0
    %1556 = vmatprep.subr.mxu0 0.0
    %1557 = vmatpush1.msra.mxu0 0.0
    %1558 = vmatprep.subr.mxu0 0.0
    %1559 = vmatpush1.msra.mxu0 0.0
    %1560 = vmatprep.subr.mxu0 0.0
    %1561 = vmatpush1.msra.mxu0 0.0
    %1562 = vmatprep.subr.mxu0 0.0
    %1563 = vmatpush1.msra.mxu0 0.0
    %1564 = vmatprep.subr.mxu0 0.0
    %1565 = vmatpush1.msra.mxu0 0.0
    %1566 = vmatprep.subr.mxu0 0.0
    %1567 = vmatpush1.msra.mxu0 0.0
    %1568 = vmatprep.subr.mxu0 0.0
    %1569 = vmatpush1.msra.mxu0 0.0
    %1570 = vmatprep.subr.mxu0 0.0
    %1571 = vmatpush1.msra.mxu0 0.0
    %1572 = vmatprep.subr.mxu0 0.0
    %1573 = vmatpush1.msra.mxu0 0.0
    %1574 = vmatprep.subr.mxu0 0.0
    %1575 = vmatpush1.msra.mxu0 0.0
    %1576 = vmatprep.subr.mxu0 0.0
    %1577 = vmatpush1.msra.mxu0 0.0
    %1578 = vmatprep.subr.mxu0 0.0
    %1579 = vmatpush1.msra.mxu0 0.0
    %1580 = vmatprep.subr.mxu0 0.0
    %1581 = vmatpush1.msra.mxu0 0.0
    %1582 = vmatprep.subr.mxu0 0.0
    %1583 = vmatpush1.msra.mxu0 0.0
    %1584 = vmatprep.subr.mxu0 0.0
    %1585 = vmatpush1.msra.mxu0 %v1549
    %1586 = vmatprep.subr.mxu0 0.0
    %1587 = vmatpush2.msra.mxu0 0.0
    %1588 = vmatprep.subr.mxu0 0.0
    %1589 = vmatpush2.msra.mxu0 0.0
    %1590 = vmatprep.subr.mxu0 0.0
    %1591 = vmatpush2.msra.mxu0 0.0
    %1592 = vmatprep.subr.mxu0 0.0
    %1593 = vmatpush2.msra.mxu0 0.0
    %1594 = vmatprep.subr.mxu0 0.0
    %1595 = vmatpush2.msra.mxu0 0.0
    %1596 = vmatprep.subr.mxu0 0.0
    %1597 = vmatpush2.msra.mxu0 0.0
    %1598 = vmatprep.subr.mxu0 0.0
    %1599 = vmatpush2.msra.mxu0 0.0
    %1600 = vmatprep.subr.mxu0 0.0
    %1601 = vmatpush2.msra.mxu0 0.0
    %1602 = vmatprep.subr.mxu0 0.0
    %1603 = vmatpush2.msra.mxu0 0.0
    %1604 = vmatprep.subr.mxu0 0.0
    %1605 = vmatpush2.msra.mxu0 0.0
    %1606 = vmatprep.subr.mxu0 0.0
    %1607 = vmatpush2.msra.mxu0 0.0
    %1608 = vmatprep.subr.mxu0 0.0
    %1609 = vmatpush2.msra.mxu0 0.0
    %1610 = vmatprep.subr.mxu0 0.0
    %1611 = vmatpush2.msra.mxu0 0.0
    %1612 = vmatprep.subr.mxu0 0.0
    %1613 = vmatpush2.msra.mxu0 0.0
    %1614 = vmatprep.subr.mxu0 0.0
    %1615 = vmatpush2.msra.mxu0 0.0
    %1616 = vmatprep.subr.mxu0 0.0
    %1617 = vmatpush2.msra.mxu0 0.0
    %1618 = vmatprep.mubr.f32.mxu0 0.0
    %1619 = vmatmul.mubr.f32.gmra.mxu0 %v1552
    %v1620 = vpop.f32.mrf.mxu0
    %v1621 = vadd.f32 0.0, %v1620
    %v1622 = vpop.f32.mrf.mxu0
    %1623 = vdwg.mxu0
    %1624 = vrot.lane.b32.xlu0 %v1023, 80
    %v1625 = vpop.permute.xlu0 %1624
    %v1628 = vsel %vm264, %v1547, 0
    %1630 = vmatprep.subr.mxu0 0.0
    %1631 = vmatpush1.msra.mxu0 0.0
    %1632 = vmatprep.subr.mxu0 0.0
    %1633 = vmatpush1.msra.mxu0 0.0
    %1634 = vmatprep.subr.mxu0 0.0
    %1635 = vmatpush1.msra.mxu0 0.0
    %1636 = vmatprep.subr.mxu0 0.0
    %1637 = vmatpush1.msra.mxu0 0.0
    %1638 = vmatprep.subr.mxu0 0.0
    %1639 = vmatpush1.msra.mxu0 0.0
    %1640 = vmatprep.subr.mxu0 0.0
    %1641 = vmatpush1.msra.mxu0 0.0
    %1642 = vmatprep.subr.mxu0 0.0
    %1643 = vmatpush1.msra.mxu0 0.0
    %1644 = vmatprep.subr.mxu0 0.0
    %1645 = vmatpush1.msra.mxu0 0.0
    %1646 = vmatprep.subr.mxu0 0.0
    %1647 = vmatpush1.msra.mxu0 0.0
    %1648 = vmatprep.subr.mxu0 0.0
    %1649 = vmatpush1.msra.mxu0 0.0
    %1650 = vmatprep.subr.mxu0 0.0
    %1651 = vmatpush1.msra.mxu0 0.0
    %1652 = vmatprep.subr.mxu0 0.0
    %1653 = vmatpush1.msra.mxu0 0.0
    %1654 = vmatprep.subr.mxu0 0.0
    %1655 = vmatpush1.msra.mxu0 0.0
    %1656 = vmatprep.subr.mxu0 0.0
    %1657 = vmatpush1.msra.mxu0 0.0
    %1658 = vmatprep.subr.mxu0 0.0
    %1659 = vmatpush1.msra.mxu0 0.0
    %1660 = vmatprep.subr.mxu0 0.0
    %1661 = vmatpush1.msra.mxu0 %v1625
    %1662 = vmatprep.subr.mxu0 0.0
    %1663 = vmatpush2.msra.mxu0 0.0
    %1664 = vmatprep.subr.mxu0 0.0
    %1665 = vmatpush2.msra.mxu0 0.0
    %1666 = vmatprep.subr.mxu0 0.0
    %1667 = vmatpush2.msra.mxu0 0.0
    %1668 = vmatprep.subr.mxu0 0.0
    %1669 = vmatpush2.msra.mxu0 0.0
    %1670 = vmatprep.subr.mxu0 0.0
    %1671 = vmatpush2.msra.mxu0 0.0
    %1672 = vmatprep.subr.mxu0 0.0
    %1673 = vmatpush2.msra.mxu0 0.0
    %1674 = vmatprep.subr.mxu0 0.0
    %1675 = vmatpush2.msra.mxu0 0.0
    %1676 = vmatprep.subr.mxu0 0.0
    %1677 = vmatpush2.msra.mxu0 0.0
    %1678 = vmatprep.subr.mxu0 0.0
    %1679 = vmatpush2.msra.mxu0 0.0
    %1680 = vmatprep.subr.mxu0 0.0
    %1681 = vmatpush2.msra.mxu0 0.0
    %1682 = vmatprep.subr.mxu0 0.0
    %1683 = vmatpush2.msra.mxu0 0.0
    %1684 = vmatprep.subr.mxu0 0.0
    %1685 = vmatpush2.msra.mxu0 0.0
    %1686 = vmatprep.subr.mxu0 0.0
    %1687 = vmatpush2.msra.mxu0 0.0
    %1688 = vmatprep.subr.mxu0 0.0
    %1689 = vmatpush2.msra.mxu0 0.0
    %1690 = vmatprep.subr.mxu0 0.0
    %1691 = vmatpush2.msra.mxu0 0.0
    %1692 = vmatprep.subr.mxu0 0.0
    %1693 = vmatpush2.msra.mxu0 0.0
    %1694 = vmatprep.mubr.f32.mxu0 0.0
    %1695 = vmatmul.mubr.f32.gmra.mxu0 %v1628
    %v1696 = vpop.f32.mrf.mxu0
    %v1697 = vadd.f32 0.0, %v1696
    %v1698 = vpop.f32.mrf.mxu0
    %1699 = vdwg.mxu0
    %1702 = vrot.lane.b32.xlu0 %v1621, 16
    %v1703 = vpop.permute.xlu0 %1702
    %1704 = vrot.lane.b32.xlu0 %v1697, 16
    %v1705 = vpop.permute.xlu0 %1704
    %v1708 = vsel %vm108, %v1289, %v1703
    %v1709 = vsel %vm108, %v1365, %v1705
    %v1710 = vld [vmem:[#allocation2 + $0x50] sm:$0xf]
    %v1711 = vld [vmem:[#allocation2 + $0x54] sm:$0xf]
    %v1712 = vld [vmem:[#allocation2 + $0x58] sm:$0xf]
    %v1713 = vld [vmem:[#allocation2 + $0x5c] sm:$0xf]
    %v1714 = vpack.c.bf16 %v1709, %v1708
    %v1715 = vlaneseq
    %v1716 = vshrl.u32 %v1715, 7
    %v1717 = vsub.s32 4, %v1716
    %v1718 = vrot.slane %v41, %v1717
    %v1723 = vunpack.c.l.b16 %v1710
    %v1724 = vunpack.c.l.b16 %v1711
    %v1725 = vunpack.c.l.b16 %v1712
    %v1726 = vunpack.c.l.b16 %v1713
    %v1727 = vpack.c.b16 %v1724, %v1723
    %v1728 = vpack.c.b16 %v1726, %v1725
    %v1732 = vsel %vm60, %v1714, 0
    %1734 = vmatprep.subr.bf16.mxu0 0
    %1735 = vmatpush1.bf16.msra.mxu0 0
    %1736 = vmatprep.subr.bf16.mxu0 0
    %1737 = vmatpush1.bf16.msra.mxu0 0
    %1738 = vmatprep.subr.bf16.mxu0 0
    %1739 = vmatpush1.bf16.msra.mxu0 0
    %1740 = vmatprep.subr.bf16.mxu0 0
    %1741 = vmatpush1.bf16.msra.mxu0 0
    %1742 = vmatprep.subr.bf16.mxu0 0
    %1743 = vmatpush1.bf16.msra.mxu0 0
    %1744 = vmatprep.subr.bf16.mxu0 0
    %1745 = vmatpush1.bf16.msra.mxu0 0
    %1746 = vmatprep.subr.bf16.mxu0 0
    %1747 = vmatpush1.bf16.msra.mxu0 %v1728
    %1748 = vmatprep.subr.bf16.mxu0 0
    %1749 = vmatpush1.bf16.msra.mxu0 %v1727
    %1750 = vmatprep.subr.bf16.mxu0 0
    %1751 = vmatpush2.bf16.msra.mxu0 0
    %1752 = vmatprep.subr.bf16.mxu0 0
    %1753 = vmatpush2.bf16.msra.mxu0 0
    %1754 = vmatprep.subr.bf16.mxu0 0
    %1755 = vmatpush2.bf16.msra.mxu0 0
    %1756 = vmatprep.subr.bf16.mxu0 0
    %1757 = vmatpush2.bf16.msra.mxu0 0
    %1758 = vmatprep.subr.bf16.mxu0 0
    %1759 = vmatpush2.bf16.msra.mxu0 0
    %1760 = vmatprep.subr.bf16.mxu0 0
    %1761 = vmatpush2.bf16.msra.mxu0 0
    %1762 = vmatprep.subr.bf16.mxu0 0
    %1763 = vmatpush2.bf16.msra.mxu0 0
    %1764 = vmatprep.subr.bf16.mxu0 0
    %1765 = vmatpush2.bf16.msra.mxu0 0
    %1766 = vmatprep.mubr.bf16.mxu0 0
    %1767 = vmatmul.mubr.bf16.gmra.mxu0 %v1732
    %v1768 = vpop.f32.mrf.mxu0
    %v1769 = vadd.f32 %v1718, %v1768
    %v1770 = vpop.f32.mrf.mxu0
    %v1771 = vpop.f32.mrf.mxu0
    %v1772 = vadd.f32 %v1718, %v1771
    %v1773 = vpop.f32.mrf.mxu0
    %1774 = vdwg.mxu0
    %v1775 = vadd.f32 %v1769, %v885
    %v1776 = vadd.f32 %v1772, %v886
    %v1777 = vsel %vm60, %v1775, 0.0
    %1778 = vadd.xlane.f32.xlu0 %v1777
    %v1779 = vpop.xlane.xlu0 %1778
    %v1780 = vsel %vm60, %v1776, 0.0
    %1781 = vadd.xlane.f32.xlu0 %v1780
    %v1782 = vpop.xlane.xlu0 %1781
    %v1783 = vmul.f32 %v1779, %v854
    %v1784 = vmul.f32 %v1782, %v854
    %v1785 = vsub.f32 %v1775, %v1783
    %v1786 = vsub.f32 %v1776, %v1784
    %v1787 = vmul.f32 %v1785, %v1785
    %v1788 = vmul.f32 %v1786, %v1786
    %v1789 = vsel %vm60, %v1787, 0.0
    %1790 = vadd.xlane.f32.xlu0 %v1789
    %v1791 = vpop.xlane.xlu0 %1790
    %v1792 = vsel %vm60, %v1788, 0.0
    %1793 = vadd.xlane.f32.xlu0 %v1792
    %v1794 = vpop.xlane.xlu0 %1793
    %v1795 = vmul.f32 %v1791, %v854
    %v1796 = vmul.f32 %v1794, %v854
    %v1797 = vadd.f32 %v1795, 1e-05
    %v1798 = vadd.f32 %v1796, 1e-05
    %v1799 = vrsqrt.pop %v1797
    %v1800 = vrsqrt.pop %v1798
    %v1801 = vmul.f32 %v1785, %v1799
    %v1802 = vmul.f32 %v1786, %v1800
    %v1803 = vlaneseq
    %v1804 = vshrl.u32 %v1803, 7
    %v1805 = vsub.s32 5, %v1804
    %v1806 = vrot.slane %v41, %v1805
    %v1807 = vmul.f32 %v1801, %v1806
    %v1808 = vmul.f32 %v1802, %v1806
    %v1809 = vlaneseq
    %v1810 = vshrl.u32 %v1809, 7
    %v1811 = vsub.s32 6, %v1810
    %v1812 = vrot.slane %v41, %v1811
    %v1813 = vadd.f32 %v1807, %v1812
    %v1814 = vadd.f32 %v1808, %v1812
    %v1815 = vld [vmem:[#allocation2 + $0x60] sm:$0xf]
    %v1816 = vld [vmem:[#allocation2 + $0x64] sm:$0xf]
    %v1817 = vld [vmem:[#allocation2 + $0x68] sm:$0xf]
    %v1818 = vld [vmem:[#allocation2 + $0x6c] sm:$0xf]
    %v1819 = vpack.c.bf16 %v1814, %v1813
    %v1820 = vlaneseq
    %v1821 = vshrl.u32 %v1820, 7
    %v1822 = vsub.s32 0, %v1821
    %v1823 = vrot.slane %v41, %v1822
    %v1828 = vunpack.c.l.b16 %v1815
    %v1829 = vunpack.c.l.b16 %v1816
    %v1830 = vunpack.c.l.b16 %v1817
    %v1831 = vunpack.c.l.b16 %v1818
    %v1832 = vpack.c.b16 %v1829, %v1828
    %v1833 = vpack.c.b16 %v1831, %v1830
    %v1837 = vsel %vm60, %v1819, 0
    %1839 = vmatprep.subr.bf16.mxu0 0
    %1840 = vmatpush1.bf16.msra.mxu0 0
    %1841 = vmatprep.subr.bf16.mxu0 0
    %1842 = vmatpush1.bf16.msra.mxu0 0
    %1843 = vmatprep.subr.bf16.mxu0 0
    %1844 = vmatpush1.bf16.msra.mxu0 0
    %1845 = vmatprep.subr.bf16.mxu0 0
    %1846 = vmatpush1.bf16.msra.mxu0 0
    %1847 = vmatprep.subr.bf16.mxu0 0
    %1848 = vmatpush1.bf16.msra.mxu0 0
    %1849 = vmatprep.subr.bf16.mxu0 0
    %1850 = vmatpush1.bf16.msra.mxu0 0
    %1851 = vmatprep.subr.bf16.mxu0 0
    %1852 = vmatpush1.bf16.msra.mxu0 %v1833
    %1853 = vmatprep.subr.bf16.mxu0 0
    %1854 = vmatpush1.bf16.msra.mxu0 %v1832
    %1855 = vmatprep.subr.bf16.mxu0 0
    %1856 = vmatpush2.bf16.msra.mxu0 0
    %1857 = vmatprep.subr.bf16.mxu0 0
    %1858 = vmatpush2.bf16.msra.mxu0 0
    %1859 = vmatprep.subr.bf16.mxu0 0
    %1860 = vmatpush2.bf16.msra.mxu0 0
    %1861 = vmatprep.subr.bf16.mxu0 0
    %1862 = vmatpush2.bf16.msra.mxu0 0
    %1863 = vmatprep.subr.bf16.mxu0 0
    %1864 = vmatpush2.bf16.msra.mxu0 0
    %1865 = vmatprep.subr.bf16.mxu0 0
    %1866 = vmatpush2.bf16.msra.mxu0 0
    %1867 = vmatprep.subr.bf16.mxu0 0
    %1868 = vmatpush2.bf16.msra.mxu0 0
    %1869 = vmatprep.subr.bf16.mxu0 0
    %1870 = vmatpush2.bf16.msra.mxu0 0
    %1871 = vmatprep.mubr.bf16.mxu0 0
    %1872 = vmatmul.mubr.bf16.gmra.mxu0 %v1837
    %v1873 = vpop.f32.mrf.mxu0
    %v1874 = vadd.f32 %v1823, %v1873
    %v1875 = vpop.f32.mrf.mxu0
    %v1876 = vpop.f32.mrf.mxu0
    %v1877 = vadd.f32 %v1823, %v1876
    %v1878 = vpop.f32.mrf.mxu0
    %1879 = vdwg.mxu0
    %v1880 = vmax.f32 %v1874, 0.0
    %v1881 = vmax.f32 %v1877, 0.0
    %v1882 = vld [vmem:[#allocation2 + $0x70] sm:$0xf]
    %v1883 = vld [vmem:[#allocation2 + $0x74] sm:$0xf]
    %v1884 = vld [vmem:[#allocation2 + $0x78] sm:$0xf]
    %v1885 = vld [vmem:[#allocation2 + $0x7c] sm:$0xf]
    %v1886 = vld [vmem:[#allocation2 + $0x80] sm:$0xf]
    %v1887 = vld [vmem:[#allocation2 + $0x84] sm:$0xf]
    %v1888 = vld [vmem:[#allocation2 + $0x88] sm:$0xf]
    %v1889 = vld [vmem:[#allocation2 + $0x8c] sm:$0xf]
    %v1890 = vld [vmem:[#allocation2 + $0x90] sm:$0xf]
    %v1891 = vld [vmem:[#allocation2 + $0x94] sm:$0xf]
    %v1892 = vld [vmem:[#allocation2 + $0x98] sm:$0xf]
    %v1893 = vld [vmem:[#allocation2 + $0x9c] sm:$0xf]
    %v1894 = vld [vmem:[#allocation2 + $0xa0] sm:$0xf]
    %v1895 = vld [vmem:[#allocation2 + $0xa4] sm:$0xf]
    %v1896 = vld [vmem:[#allocation2 + $0xa8] sm:$0xf]
    %v1897 = vld [vmem:[#allocation2 + $0xac] sm:$0xf]
    %v1898 = vpack.c.bf16 %v1881, %v1880
    %v1899 = vlaneseq
    %v1900 = vshrl.u32 %v1899, 7
    %v1901 = vsub.s32 7, %v1900
    %v1902 = vrot.slane %v41, %v1901
    %v1919 = vunpack.c.l.b16 %v1882
    %v1920 = vunpack.c.l.b16 %v1883
    %v1921 = vunpack.c.l.b16 %v1884
    %v1922 = vunpack.c.l.b16 %v1885
    %v1923 = vunpack.c.l.b16 %v1886
    %v1924 = vunpack.c.l.b16 %v1887
    %v1925 = vunpack.c.l.b16 %v1888
    %v1926 = vunpack.c.l.b16 %v1889
    %v1927 = vunpack.c.l.b16 %v1890
    %v1928 = vunpack.c.l.b16 %v1891
    %v1929 = vunpack.c.l.b16 %v1892
    %v1930 = vunpack.c.l.b16 %v1893
    %v1931 = vunpack.c.l.b16 %v1894
    %v1932 = vunpack.c.l.b16 %v1895
    %v1933 = vunpack.c.l.b16 %v1896
    %v1934 = vunpack.c.l.b16 %v1897
    %v1935 = vpack.c.b16 %v1920, %v1919
    %v1936 = vpack.c.b16 %v1922, %v1921
    %v1937 = vpack.c.b16 %v1924, %v1923
    %v1938 = vpack.c.b16 %v1926, %v1925
    %v1939 = vpack.c.b16 %v1928, %v1927
    %v1940 = vpack.c.b16 %v1930, %v1929
    %v1941 = vpack.c.b16 %v1932, %v1931
    %v1942 = vpack.c.b16 %v1934, %v1933
    %1951 = vmatprep.subr.bf16.mxu0 0
    %1952 = vmatpush1.bf16.msra.mxu0 %v1942
    %1953 = vmatprep.subr.bf16.mxu0 0
    %1954 = vmatpush1.bf16.msra.mxu0 %v1941
    %1955 = vmatprep.subr.bf16.mxu0 0
    %1956 = vmatpush1.bf16.msra.mxu0 %v1940
    %1957 = vmatprep.subr.bf16.mxu0 0
    %1958 = vmatpush1.bf16.msra.mxu0 %v1939
    %1959 = vmatprep.subr.bf16.mxu0 0
    %1960 = vmatpush1.bf16.msra.mxu0 %v1938
    %1961 = vmatprep.subr.bf16.mxu0 0
    %1962 = vmatpush1.bf16.msra.mxu0 %v1937
    %1963 = vmatprep.subr.bf16.mxu0 0
    %1964 = vmatpush1.bf16.msra.mxu0 %v1936
    %1965 = vmatprep.subr.bf16.mxu0 0
    %1966 = vmatpush1.bf16.msra.mxu0 %v1935
    %1967 = vmatprep.subr.bf16.mxu0 0
    %1968 = vmatpush2.bf16.msra.mxu0 0
    %1969 = vmatprep.subr.bf16.mxu0 0
    %1970 = vmatpush2.bf16.msra.mxu0 0
    %1971 = vmatprep.subr.bf16.mxu0 0
    %1972 = vmatpush2.bf16.msra.mxu0 0
    %1973 = vmatprep.subr.bf16.mxu0 0
    %1974 = vmatpush2.bf16.msra.mxu0 0
    %1975 = vmatprep.subr.bf16.mxu0 0
    %1976 = vmatpush2.bf16.msra.mxu0 0
    %1977 = vmatprep.subr.bf16.mxu0 0
    %1978 = vmatpush2.bf16.msra.mxu0 0
    %1979 = vmatprep.subr.bf16.mxu0 0
    %1980 = vmatpush2.bf16.msra.mxu0 0
    %1981 = vmatprep.subr.bf16.mxu0 0
    %1982 = vmatpush2.bf16.msra.mxu0 0
    %1983 = vmatprep.mubr.bf16.mxu0 0
    %1984 = vmatmul.mubr.bf16.gmra.mxu0 %v1898
    %v1985 = vpop.f32.mrf.mxu0
    %v1986 = vadd.f32 %v1902, %v1985
    %v1987 = vpop.f32.mrf.mxu0
    %v1988 = vpop.f32.mrf.mxu0
    %v1989 = vadd.f32 %v1902, %v1988
    %v1990 = vpop.f32.mrf.mxu0
    %1991 = vdwg.mxu0
    %v1992 = vadd.f32 %v1986, %v1813
    %v1993 = vadd.f32 %v1989, %v1814
    %v1994 = vsel %vm60, %v1992, 0.0
    %1995 = vadd.xlane.f32.xlu0 %v1994
    %v1996 = vpop.xlane.xlu0 %1995
    %v1997 = vsel %vm60, %v1993, 0.0
    %1998 = vadd.xlane.f32.xlu0 %v1997
    %v1999 = vpop.xlane.xlu0 %1998
    %v2000 = vmul.f32 %v1996, %v854
    %v2001 = vmul.f32 %v1999, %v854
    %v2002 = vsub.f32 %v1992, %v2000
    %v2003 = vsub.f32 %v1993, %v2001
    %v2004 = vmul.f32 %v2002, %v2002
    %v2005 = vmul.f32 %v2003, %v2003
    %v2006 = vsel %vm60, %v2004, 0.0
    %2007 = vadd.xlane.f32.xlu0 %v2006
    %v2008 = vpop.xlane.xlu0 %2007
    %v2009 = vsel %vm60, %v2005, 0.0
    %2010 = vadd.xlane.f32.xlu0 %v2009
    %v2011 = vpop.xlane.xlu0 %2010
    %v2012 = vmul.f32 %v2008, %v854
    %v2013 = vmul.f32 %v2011, %v854
    %v2014 = vadd.f32 %v2012, 1e-05
    %v2015 = vadd.f32 %v2013, 1e-05
    %v2016 = vrsqrt.pop %v2014
    %v2017 = vrsqrt.pop %v2015
    %v2018 = vmul.f32 %v2002, %v2016
    %v2019 = vmul.f32 %v2003, %v2017
    %v2020 = vlaneseq
    %v2021 = vshrl.u32 %v2020, 7
    %v2022 = vsub.s32 0, %v2021
    %v2023 = vrot.slane %v42, %v2022
    %v2024 = vmul.f32 %v2018, %v2023
    %v2025 = vmul.f32 %v2019, %v2023
    %v2026 = vlaneseq
    %v2027 = vshrl.u32 %v2026, 7
    %v2028 = vsub.s32 1, %v2027
    %v2029 = vrot.slane %v42, %v2028
    %v2030 = vadd.f32 %v2024, %v2029
    %v2031 = vadd.f32 %v2025, %v2029
    %2032 = vst.msk [vmem:[#allocation5] sm:$0xff] %vm60, %v2030
    %2033 = vst.msk [vmem:[#allocation5 + $0x8] sm:$0xff] %vm60, %v2031
    // Predicated region
    $region22: #{tpu_custom_call.1} parent=1 // pred_check
      _
    $region23: #{tpu_custom_call.1} parent=1 // pred_check_branch
      %2035 = sbr.rel (0) target = $region25
    $region24: #{tpu_custom_call.1} parent=1 // pred_region
      %s2037 = ssub.s32 256, 256
      %2038 = vsyncadd [#allocation4], %s2037
      %s2039 = sshll.u32 [#allocation5], 4
      %s2040 = int_to_ptr.vmem [resolvable:$true] %s2039
      %2045 = dma.vmem_to_hbm [thread:$0]  %s2040, 256, %s4, [#allocation4], 128, 128, 8
    $region25: #{tpu_custom_call.1} parent=1 // pred_fallthru
      _
    // Predicated region
    $region26: #{tpu_custom_call.1} parent=1 // pred_check
      _
    $region27: #{tpu_custom_call.1} parent=1 // pred_check_branch
      %2047 = sbr.rel (0) target = $region29
    $region28: #{tpu_custom_call.1} parent=1 // pred_region
      %2048 = dma.done [#allocation4], 256
    $region29: #{tpu_custom_call.1} parent=1 // pred_fallthru
      _
    %2049 = vsyncpa [#allocation3], 1
    %2050 = vsyncpa [#allocation4], 1

</llo_original>
